<compile_context>
chip_gen: v5e
topology: v5e:2x2
jax: 0.10.0
libtpu: 0.0.40
codegen_flags: <defaults>
</compile_context>

<pallas_src>
import jax
import jax.numpy as jnp
from jax.experimental import pallas as pl
from jax.experimental.pallas import tpu as pltpu


def _round_up(x, m):
    return ((x + m - 1) // m) * m


def mlp_kernel(x_ref, w1_ref, b1_ref, w2_ref, b2_ref, o_ref):
    # x arrives f32 (no wrapper cast pass); cast to bf16 in-register for the MXU.
    x = x_ref[...].astype(jnp.bfloat16)
    # Linear 1: bf16 inputs, f32 MXU accumulation; bias + ReLU in f32.
    h = jnp.dot(x, w1_ref[...], preferred_element_type=jnp.float32)
    h = jnp.maximum(h + b1_ref[...], 0.0)
    # Dropout(0.3): identity in eval mode.
    # Linear 2: cast activations to bf16 for the MXU, accumulate in f32.
    y = jnp.dot(h.astype(w2_ref.dtype), w2_ref[...],
                preferred_element_type=jnp.float32)
    o_ref[...] = (y + b2_ref[...]).astype(o_ref.dtype)


def prepare_params(w1, b1, w2, b2):
    """One-time (model-load) parameter prep — NOT in the per-call hot path.

    w1: [in, hidden], w2: [hidden, classes]  (already transposed relative to
    torch.nn.Linear.weight). Returns bf16 weights, f32 biases, with the class
    dim padded up to a multiple of 128 so the kernel's output store is a
    lane-dense, unmasked vst.
    """
    C = w2.shape[1]
    C_pad = _round_up(C, 128)
    return {
        "w1": jnp.asarray(w1, jnp.bfloat16),
        "b1": jnp.asarray(b1, jnp.float32).reshape(1, -1),
        "w2": jnp.pad(jnp.asarray(w2), ((0, 0), (0, C_pad - C))
                      ).astype(jnp.bfloat16),
        "b2": jnp.pad(jnp.asarray(b2, jnp.float32).reshape(1, -1),
                      ((0, 0), (0, C_pad - C))),
        "num_classes": C,
    }


def extended_classifier_forward(x, params, *, tile_m_max=512, training=False):
    """x: [B, input_dim] f32. params: output of prepare_params().
    Returns [B, num_classes] f32 logits (eval-mode forward)."""
    if training:
        raise NotImplementedError(
            "Train-mode Dropout(0.3) not implemented; eval-mode forward only.")

    w1, b1, w2, b2 = params["w1"], params["b1"], params["w2"], params["b2"]
    C = params["num_classes"]
    B, D = x.shape
    H = w1.shape[1]
    C_pad = w2.shape[1]

    # Tile selection: fewest tiles of size <= tile_m_max, rounded to a multiple
    # of 16 (bf16 sublane packing). Padding waste is bounded by ~15 rows/tile.
    n_tiles = pl.cdiv(B, tile_m_max)
    tile_m = _round_up(pl.cdiv(B, n_tiles), 16)
    B_pad = n_tiles * tile_m

    # Minimal batch padding only when needed; x stays f32 (cast is in-kernel).
    x_p = x if B_pad == B else jnp.pad(x, ((0, B_pad - B), (0, 0)))

    out_padded = pl.pallas_call(
        mlp_kernel,
        out_shape=jax.ShapeDtypeStruct((B_pad, C_pad), jnp.float32),
        grid_spec=pltpu.PrefetchScalarGridSpec(
            num_scalar_prefetch=0,
            grid=(n_tiles,),
            in_specs=[
                # x batch tile: double-buffered (default) so DMA overlaps compute.
                pl.BlockSpec((tile_m, D), lambda i: (i, 0)),
                # Weights/biases: constant index maps -> resident across the
                # grid; single-buffered to save VMEM and one prologue DMA.
                pl.BlockSpec((D, H), lambda i: (0, 0),
                             pipeline_mode=pl.Buffered(1)),
                pl.BlockSpec((1, H), lambda i: (0, 0),
                             pipeline_mode=pl.Buffered(1)),
                pl.BlockSpec((H, C_pad), lambda i: (0, 0),
                             pipeline_mode=pl.Buffered(1)),
                pl.BlockSpec((1, C_pad), lambda i: (0, 0),
                             pipeline_mode=pl.Buffered(1)),
            ],
            out_specs=pl.BlockSpec((tile_m, C_pad), lambda i: (i, 0)),
        ),
        compiler_params=pltpu.CompilerParams(
            # Batch tiles are independent; note this alone does not guarantee
            # cross-TensorCore sharding on v7x (see TODO above).
            dimension_semantics=("parallel",),
            vmem_limit_bytes=32 * 1024 * 1024,
        ),
    )(x_p, w1, b1, w2, b2)

    # Drop batch padding (padded rows hold ReLU(b1)@W2+b2 garbage) and the
    # padded class columns; callers must never see out_padded directly.
    return out_padded[:B, :C]


def init_params(key, input_dim, hidden_dim, num_classes, dtype=jnp.float32):
    """Deterministic synthetic init (PyTorch-style uniform ranges)."""
    k1, k2, k3, k4 = jax.random.split(key, 4)
    lim1 = 1.0 / (input_dim ** 0.5)
    lim2 = 1.0 / (hidden_dim ** 0.5)
    # stored transposed relative to torch.nn.Linear.weight: [in, out]
    w1 = jax.random.uniform(k1, (input_dim, hidden_dim), dtype, -lim1, lim1)
    b1 = jax.random.uniform(k2, (hidden_dim,), dtype, -lim1, lim1)
    w2 = jax.random.uniform(k3, (hidden_dim, num_classes), dtype, -lim2, lim2)
    b2 = jax.random.uniform(k4, (num_classes,), dtype, -lim2, lim2)
    return w1, b1, w2, b2


if __name__ == "__main__":
    input_dim = 1024
    hidden_dim = 512
    num_classes = 30
    batch = 37           # not a multiple of 16 -> exercises the padding path

    key = jax.random.PRNGKey(0)
    kx, kp = jax.random.split(key)
    x = jax.random.normal(kx, (batch, input_dim), jnp.float32)
    w1, b1, w2, b2 = init_params(kp, input_dim, hidden_dim, num_classes)

    # One-time weight prep (model-load time), then the hot-path forward.
    params = prepare_params(w1, b1, w2, b2)
    out = extended_classifier_forward(x, params, tile_m_max=512)
    out = jax.block_until_ready(out)
    assert out.shape == (batch, num_classes)

    # Reference mirroring the kernel's bf16-input / f32-accumulate math.
    xb = x.astype(jnp.bfloat16)
    w1b = w1.astype(jnp.bfloat16)
    w2b = w2.astype(jnp.bfloat16)
    h_ref = jnp.maximum(
        jnp.dot(xb, w1b, preferred_element_type=jnp.float32)
        + b1.reshape(1, -1), 0.0)
    ref = jnp.dot(h_ref.astype(jnp.bfloat16), w2b,
                  preferred_element_type=jnp.float32) + b2.reshape(1, -1)
    assert jnp.allclose(out, ref, atol=1e-2, rtol=1e-2), (
        float(jnp.max(jnp.abs(out - ref))))

    # Loose sanity check against a pure-f32 reference as well.
    ref_f32 = jnp.maximum(x @ w1 + b1.reshape(1, -1), 0.0) @ w2 + b2.reshape(1, -1)
    assert jnp.allclose(out, ref_f32, atol=5e-2, rtol=5e-2)

    print("KERNEL_OK")
</pallas_src>

<mosaic_0001>
module attributes {stable_mosaic.version = 11 : i64} {
  func.func @mlp_kernel(%arg0: i32, %arg1: memref<48x1024xf32, #tpu.memory_space<vmem>>, %arg2: memref<1024x512xbf16, #tpu.memory_space<vmem>>, %arg3: memref<1x512xf32, #tpu.memory_space<vmem>>, %arg4: memref<512x128xbf16, #tpu.memory_space<vmem>>, %arg5: memref<1x128xf32, #tpu.memory_space<vmem>>, %arg6: memref<48x128xf32, #tpu.memory_space<vmem>>) attributes {dimension_semantics = [#tpu.dimension_semantics<parallel>], iteration_bounds = array<i64: 1>, scalar_prefetch = 0 : i64, scratch_operands = 0 : i64, tpu.core_type = #tpu.core_type<tc>, window_params = [{transform_indices = @transform_0, window_bounds = array<i64: 48, 1024>}, {pipeline_mode = #tpu.pipeline_mode<synchronous>, transform_indices = @transform_1, window_bounds = array<i64: 1024, 512>}, {pipeline_mode = #tpu.pipeline_mode<synchronous>, transform_indices = @transform_2, window_bounds = array<i64: 1, 512>}, {pipeline_mode = #tpu.pipeline_mode<synchronous>, transform_indices = @transform_3, window_bounds = array<i64: 512, 128>}, {pipeline_mode = #tpu.pipeline_mode<synchronous>, transform_indices = @transform_4, window_bounds = array<i64: 1, 128>}, {transform_indices = @transform_5, window_bounds = array<i64: 48, 128>}]} {
    %c0 = arith.constant 0 : index
    %c0_0 = arith.constant 0 : index
    %0 = vector.load %arg1[%c0, %c0_0] : memref<48x1024xf32, #tpu.memory_space<vmem>>, vector<48x1024xf32>
    %1 = arith.truncf %0 : vector<48x1024xf32> to vector<48x1024xbf16>
    %c0_1 = arith.constant 0 : index
    %c0_2 = arith.constant 0 : index
    %2 = vector.load %arg2[%c0_1, %c0_2] : memref<1024x512xbf16, #tpu.memory_space<vmem>>, vector<1024x512xbf16>
    %cst = arith.constant dense<0.000000e+00> : vector<48x512xf32>
    %3 = tpu.matmul %1, %2, %cst {dimension_numbers = #tpu.dot_dimension_numbers<[1], [0], [0], [1], [0, 0, 1, 1], [], []>} : vector<48x1024xbf16>, vector<1024x512xbf16>, vector<48x512xf32> -> vector<48x512xf32>
    %c0_3 = arith.constant 0 : index
    %c0_4 = arith.constant 0 : index
    %4 = vector.load %arg3[%c0_3, %c0_4] : memref<1x512xf32, #tpu.memory_space<vmem>>, vector<1x512xf32>
    %5 = vector.broadcast %4 : vector<1x512xf32> to vector<48x512xf32>
    %6 = arith.addf %3, %5 : vector<48x512xf32>
    %cst_5 = arith.constant 0.000000e+00 : f32
    %7 = vector.broadcast %cst_5 : f32 to vector<48x512xf32>
    %8 = arith.maximumf %6, %7 : vector<48x512xf32>
    %9 = arith.truncf %8 : vector<48x512xf32> to vector<48x512xbf16>
    %c0_6 = arith.constant 0 : index
    %c0_7 = arith.constant 0 : index
    %10 = vector.load %arg4[%c0_6, %c0_7] : memref<512x128xbf16, #tpu.memory_space<vmem>>, vector<512x128xbf16>
    %cst_8 = arith.constant dense<0.000000e+00> : vector<48x128xf32>
    %11 = tpu.matmul %9, %10, %cst_8 {dimension_numbers = #tpu.dot_dimension_numbers<[1], [0], [0], [1], [0, 0, 1, 1], [], []>} : vector<48x512xbf16>, vector<512x128xbf16>, vector<48x128xf32> -> vector<48x128xf32>
    %c0_9 = arith.constant 0 : index
    %c0_10 = arith.constant 0 : index
    %12 = vector.load %arg5[%c0_9, %c0_10] : memref<1x128xf32, #tpu.memory_space<vmem>>, vector<1x128xf32>
    %13 = vector.broadcast %12 : vector<1x128xf32> to vector<48x128xf32>
    %14 = arith.addf %11, %13 : vector<48x128xf32>
    %c0_11 = arith.constant 0 : index
    %c0_12 = arith.constant 0 : index
    %15 = vector.load %arg6[%c0_11, %c0_12] : memref<48x128xf32, #tpu.memory_space<vmem>>, vector<48x128xf32>
    tpu.vector_store %arg6[%c0_11, %c0_12], %14 {strides = array<i32>} : memref<48x128xf32, #tpu.memory_space<vmem>>, vector<48x128xf32>,
    return
  }
  func.func @transform_0(%arg0: i32) -> (i32, i32) {
    %c0_i32 = arith.constant 0 : i32
    %c0_i32_0 = arith.constant 0 : i32
    return %arg0, %c0_i32 : i32, i32
  }
  func.func @transform_1(%arg0: i32) -> (i32, i32) {
    %c0_i32 = arith.constant 0 : i32
    %c0_i32_0 = arith.constant 0 : i32
    %c0_i32_1 = arith.constant 0 : i32
    return %c0_i32, %c0_i32_0 : i32, i32
  }
  func.func @transform_2(%arg0: i32) -> (i32, i32) {
    %c0_i32 = arith.constant 0 : i32
    %c0_i32_0 = arith.constant 0 : i32
    %c0_i32_1 = arith.constant 0 : i32
    return %c0_i32, %c0_i32_0 : i32, i32
  }
  func.func @transform_3(%arg0: i32) -> (i32, i32) {
    %c0_i32 = arith.constant 0 : i32
    %c0_i32_0 = arith.constant 0 : i32
    %c0_i32_1 = arith.constant 0 : i32
    return %c0_i32, %c0_i32_0 : i32, i32
  }
  func.func @transform_4(%arg0: i32) -> (i32, i32) {
    %c0_i32 = arith.constant 0 : i32
    %c0_i32_0 = arith.constant 0 : i32
    %c0_i32_1 = arith.constant 0 : i32
    return %c0_i32, %c0_i32_0 : i32, i32
  }
  func.func @transform_5(%arg0: i32) -> (i32, i32) {
    %c0_i32 = arith.constant 0 : i32
    %c0_i32_0 = arith.constant 0 : i32
    return %arg0, %c0_i32 : i32, i32
  }
}

</mosaic_0001>

<llo_original>
// kernel: tpu_custom_call.1
$region0: #{tpu_custom_call.1}
  #allocation0 [shape = 'u32[]', space=smem, size = 0x4, offset = 0x4, fixed_abs, tag = 'smem constant byte address 0x4 - core index']
  #allocation1 [shape = 'u32[72,128]{1,0:T(1,128)}', space=vmem, size = 0x9000, scoped, tag = 'internal scratch']
  %s0 = inlined_call_operand.hbm [shape: f32[48,1024], index: 0, kind: input, shape index: {}]
  %s1 = inlined_call_operand.hbm [shape: bf16[1024,512], index: 1, kind: input, shape index: {}]
  %s2 = inlined_call_operand.hbm [shape: f32[1,512], index: 2, kind: input, shape index: {}]
  %s3 = inlined_call_operand.hbm [shape: bf16[512,128], index: 3, kind: input, shape index: {}]
  %s4 = inlined_call_operand.vmem [shape: f32[1,128], index: 4, kind: input, shape index: {}]
  %s5 = inlined_call_operand.hbm [shape: f32[48,128], index: 5, kind: output, shape index: {}]
  %s6 = sld [smem:[#allocation0]]
  $region46: #{tpu_custom_call.1} parent=0
    _
  %s8 = ssub.s32 1, %s6
  %s9 = scalar_select 0, %s8, %s6
  $region1: #{tpu_custom_call.1} parent=0
    #allocation2 [shape = 'u8[196608]{0}', space=vmem, size = 0x30000, scoped, tag = 'input window, operand 0, single buffered']
    #allocation3 [shape = 's32[1]{0}', space=sflag, size = 0x4, scoped, tag = 'scoped memory for tpu_custom_call.1']
    #allocation4 [shape = 's32[1]{0}', space=sflag, size = 0x4, scoped, tag = 'scoped memory for tpu_custom_call.1']
    #allocation5 [shape = 'u8[1048576]{0}', space=vmem, size = 0x100000, scoped, tag = 'input window, operand 1, single buffered']
    #allocation6 [shape = 's32[1]{0}', space=sflag, size = 0x4, scoped, tag = 'scoped memory for tpu_custom_call.1']
    #allocation7 [shape = 'u8[2048]{0}', space=vmem, size = 0x800, scoped, tag = 'input window, operand 2, single buffered']
    #allocation8 [shape = 'u8[131072]{0}', space=vmem, size = 0x20000, scoped, tag = 'input window, operand 3, single buffered']
    #allocation9 [shape = 's32[1]{0}', space=sflag, size = 0x4, scoped, tag = 'scoped memory for tpu_custom_call.1']
    #allocation10 [shape = 'u8[24576]{0}', space=vmem, size = 0x6000, scoped, tag = 'output window, operand 0, single buffered']
    %10 = vsyncpa [#allocation3], 0
    %11 = vsyncpa [#allocation6], 0
    %12 = vsyncpa [#allocation9], 0
    %13 = vsyncpa [#allocation4], 0
    // Predicated region
    $region2: #{tpu_custom_call.1} parent=1 // pred_check
      _
    $region3: #{tpu_custom_call.1} parent=1 // pred_check_branch
      %15 = sbr.rel (0) target = $region5
    $region4: #{tpu_custom_call.1} parent=1 // pred_region
      %17 = vsyncadd [#allocation3], 0
      %s18 = sshll.u32 %s0, 4
      %s19 = int_to_ptr.hbm [resolvable:$true] %s18
      %s20 = sshll.u32 [#allocation2], 4
      %s21 = int_to_ptr.vmem [resolvable:$true] %s20
      %26 = dma.hbm_to_vmem [thread:$0]  %s19, 6144, %s21, [#allocation3], 1024, 1024, 64
    $region5: #{tpu_custom_call.1} parent=1 // pred_fallthru
      _
    // Predicated region
    $region6: #{tpu_custom_call.1} parent=1 // pred_check
      _
    $region7: #{tpu_custom_call.1} parent=1 // pred_check_branch
      %28 = sbr.rel (0) target = $region9
    $region8: #{tpu_custom_call.1} parent=1 // pred_region
      %30 = vsyncadd [#allocation6], 0
      %s31 = sshll.u32 %s1, 4
      %s32 = int_to_ptr.hbm [resolvable:$true] %s31
      %s33 = sshll.u32 [#allocation5], 4
      %s34 = int_to_ptr.vmem [resolvable:$true] %s33
      %39 = dma.hbm_to_vmem [thread:$0]  %s32, 32768, %s34, [#allocation6], 256, 256, 16
    $region9: #{tpu_custom_call.1} parent=1 // pred_fallthru
      _
    // Predicated region
    $region10: #{tpu_custom_call.1} parent=1 // pred_check
      _
    $region11: #{tpu_custom_call.1} parent=1 // pred_check_branch
      %41 = sbr.rel (0) target = $region13
    $region12: #{tpu_custom_call.1} parent=1 // pred_region
      %43 = vsyncadd [#allocation6], 0
      %s45 = sshll.u32 %s2, 4
      %s46 = int_to_ptr.hbm [resolvable:$true] %s45
      %s47 = sshll.u32 [#allocation7], 4
      %s48 = int_to_ptr.vmem [resolvable:$true] %s47
      %50 = dma.hbm_to_vmem [thread:$0]  %s46, 64, %s48, [#allocation6]
    $region13: #{tpu_custom_call.1} parent=1 // pred_fallthru
      _
    // Predicated region
    $region14: #{tpu_custom_call.1} parent=1 // pred_check
      _
    $region15: #{tpu_custom_call.1} parent=1 // pred_check_branch
      %52 = sbr.rel (0) target = $region17
    $region16: #{tpu_custom_call.1} parent=1 // pred_region
      %54 = vsyncadd [#allocation9], 0
      %s55 = sshll.u32 %s3, 4
      %s56 = int_to_ptr.hbm [resolvable:$true] %s55
      %s57 = sshll.u32 [#allocation8], 4
      %s58 = int_to_ptr.vmem [resolvable:$true] %s57
      %63 = dma.hbm_to_vmem [thread:$0]  %s56, 4096, %s58, [#allocation9], 64, 64, 4
    $region17: #{tpu_custom_call.1} parent=1 // pred_fallthru
      _
    // Predicated region
    $region18: #{tpu_custom_call.1} parent=1 // pred_check
      _
    $region19: #{tpu_custom_call.1} parent=1 // pred_check_branch
      %65 = sbr.rel (0) target = $region21
    $region20: #{tpu_custom_call.1} parent=1 // pred_region
      _
    $region21: #{tpu_custom_call.1} parent=1 // pred_fallthru
      _
    // Predicated region
    $region22: #{tpu_custom_call.1} parent=1 // pred_check
      _
    $region23: #{tpu_custom_call.1} parent=1 // pred_check_branch
      %67 = sbr.rel (0) target = $region25
    $region24: #{tpu_custom_call.1} parent=1 // pred_region
      %69 = dma.done [#allocation3], 6144
    $region25: #{tpu_custom_call.1} parent=1 // pred_fallthru
      _
    // Predicated region
    $region26: #{tpu_custom_call.1} parent=1 // pred_check
      _
    $region27: #{tpu_custom_call.1} parent=1 // pred_check_branch
      %71 = sbr.rel (0) target = $region29
    $region28: #{tpu_custom_call.1} parent=1 // pred_region
      %73 = dma.done [#allocation6], 32768
    $region29: #{tpu_custom_call.1} parent=1 // pred_fallthru
      _
    // Predicated region
    $region30: #{tpu_custom_call.1} parent=1 // pred_check
      _
    $region31: #{tpu_custom_call.1} parent=1 // pred_check_branch
      %75 = sbr.rel (0) target = $region33
    $region32: #{tpu_custom_call.1} parent=1 // pred_region
      %77 = dma.done [#allocation6], 64
    $region33: #{tpu_custom_call.1} parent=1 // pred_fallthru
      _
    // Predicated region
    $region34: #{tpu_custom_call.1} parent=1 // pred_check
      _
    $region35: #{tpu_custom_call.1} parent=1 // pred_check_branch
      %79 = sbr.rel (0) target = $region37
    $region36: #{tpu_custom_call.1} parent=1 // pred_region
      %81 = dma.done [#allocation9], 4096
    $region37: #{tpu_custom_call.1} parent=1 // pred_fallthru
      _
    %v82 = vld [vmem:[#allocation2] sm:$0xff]
    %v83 = vld [vmem:[#allocation2 + $0x8] sm:$0xff]
    %v84 = vld [vmem:[#allocation2 + $0x10] sm:$0xff]
    %v85 = vld [vmem:[#allocation2 + $0x18] sm:$0xff]
    %v86 = vld [vmem:[#allocation2 + $0x20] sm:$0xff]
    %v87 = vld [vmem:[#allocation2 + $0x28] sm:$0xff]
    %v88 = vld [vmem:[#allocation2 + $0x30] sm:$0xff]
    %v89 = vld [vmem:[#allocation2 + $0x38] sm:$0xff]
    %v90 = vld [vmem:[#allocation2 + $0x40] sm:$0xff]
    %v91 = vld [vmem:[#allocation2 + $0x48] sm:$0xff]
    %v92 = vld [vmem:[#allocation2 + $0x50] sm:$0xff]
    %v93 = vld [vmem:[#allocation2 + $0x58] sm:$0xff]
    %v94 = vld [vmem:[#allocation2 + $0x60] sm:$0xff]
    %v95 = vld [vmem:[#allocation2 + $0x68] sm:$0xff]
    %v96 = vld [vmem:[#allocation2 + $0x70] sm:$0xff]
    %v97 = vld [vmem:[#allocation2 + $0x78] sm:$0xff]
    %v98 = vld [vmem:[#allocation2 + $0x80] sm:$0xff]
    %v99 = vld [vmem:[#allocation2 + $0x88] sm:$0xff]
    %v100 = vld [vmem:[#allocation2 + $0x90] sm:$0xff]
    %v101 = vld [vmem:[#allocation2 + $0x98] sm:$0xff]
    %v102 = vld [vmem:[#allocation2 + $0xa0] sm:$0xff]
    %v103 = vld [vmem:[#allocation2 + $0xa8] sm:$0xff]
    %v104 = vld [vmem:[#allocation2 + $0xb0] sm:$0xff]
    %v105 = vld [vmem:[#allocation2 + $0xb8] sm:$0xff]
    %v106 = vld [vmem:[#allocation2 + $0xc0] sm:$0xff]
    %v107 = vld [vmem:[#allocation2 + $0xc8] sm:$0xff]
    %v108 = vld [vmem:[#allocation2 + $0xd0] sm:$0xff]
    %v109 = vld [vmem:[#allocation2 + $0xd8] sm:$0xff]
    %v110 = vld [vmem:[#allocation2 + $0xe0] sm:$0xff]
    %v111 = vld [vmem:[#allocation2 + $0xe8] sm:$0xff]
    %v112 = vld [vmem:[#allocation2 + $0xf0] sm:$0xff]
    %v113 = vld [vmem:[#allocation2 + $0xf8] sm:$0xff]
    %v114 = vld [vmem:[#allocation2 + $0x100] sm:$0xff]
    %v115 = vld [vmem:[#allocation2 + $0x108] sm:$0xff]
    %v116 = vld [vmem:[#allocation2 + $0x110] sm:$0xff]
    %v117 = vld [vmem:[#allocation2 + $0x118] sm:$0xff]
    %v118 = vld [vmem:[#allocation2 + $0x120] sm:$0xff]
    %v119 = vld [vmem:[#allocation2 + $0x128] sm:$0xff]
    %v120 = vld [vmem:[#allocation2 + $0x130] sm:$0xff]
    %v121 = vld [vmem:[#allocation2 + $0x138] sm:$0xff]
    %v122 = vld [vmem:[#allocation2 + $0x140] sm:$0xff]
    %v123 = vld [vmem:[#allocation2 + $0x148] sm:$0xff]
    %v124 = vld [vmem:[#allocation2 + $0x150] sm:$0xff]
    %v125 = vld [vmem:[#allocation2 + $0x158] sm:$0xff]
    %v126 = vld [vmem:[#allocation2 + $0x160] sm:$0xff]
    %v127 = vld [vmem:[#allocation2 + $0x168] sm:$0xff]
    %v128 = vld [vmem:[#allocation2 + $0x170] sm:$0xff]
    %v129 = vld [vmem:[#allocation2 + $0x178] sm:$0xff]
    %v130 = vpack.c.bf16 %v90, %v82
    %v131 = vpack.c.bf16 %v91, %v83
    %v132 = vpack.c.bf16 %v92, %v84
    %v133 = vpack.c.bf16 %v93, %v85
    %v134 = vpack.c.bf16 %v94, %v86
    %v135 = vpack.c.bf16 %v95, %v87
    %v136 = vpack.c.bf16 %v96, %v88
    %v137 = vpack.c.bf16 %v97, %v89
    %v138 = vpack.c.bf16 %v106, %v98
    %v139 = vpack.c.bf16 %v107, %v99
    %v140 = vpack.c.bf16 %v108, %v100
    %v141 = vpack.c.bf16 %v109, %v101
    %v142 = vpack.c.bf16 %v110, %v102
    %v143 = vpack.c.bf16 %v111, %v103
    %v144 = vpack.c.bf16 %v112, %v104
    %v145 = vpack.c.bf16 %v113, %v105
    %v146 = vpack.c.bf16 %v122, %v114
    %v147 = vpack.c.bf16 %v123, %v115
    %v148 = vpack.c.bf16 %v124, %v116
    %v149 = vpack.c.bf16 %v125, %v117
    %v150 = vpack.c.bf16 %v126, %v118
    %v151 = vpack.c.bf16 %v127, %v119
    %v152 = vpack.c.bf16 %v128, %v120
    %v153 = vpack.c.bf16 %v129, %v121
    %v154 = vld [vmem:[#allocation5] sm:$0xff]
    %v155 = vld [vmem:[#allocation5 + $0x8] sm:$0xff]
    %v156 = vld [vmem:[#allocation5 + $0x10] sm:$0xff]
    %v157 = vld [vmem:[#allocation5 + $0x18] sm:$0xff]
    %v158 = vld [vmem:[#allocation5 + $0x20] sm:$0xff]
    %v159 = vld [vmem:[#allocation5 + $0x28] sm:$0xff]
    %v160 = vld [vmem:[#allocation5 + $0x30] sm:$0xff]
    %v161 = vld [vmem:[#allocation5 + $0x38] sm:$0xff]
    %v162 = vld [vmem:[#allocation5 + $0x40] sm:$0xff]
    %v163 = vld [vmem:[#allocation5 + $0x48] sm:$0xff]
    %v164 = vld [vmem:[#allocation5 + $0x50] sm:$0xff]
    %v165 = vld [vmem:[#allocation5 + $0x58] sm:$0xff]
    %v166 = vld [vmem:[#allocation5 + $0x60] sm:$0xff]
    %v167 = vld [vmem:[#allocation5 + $0x68] sm:$0xff]
    %v168 = vld [vmem:[#allocation5 + $0x70] sm:$0xff]
    %v169 = vld [vmem:[#allocation5 + $0x78] sm:$0xff]
    %v170 = vld [vmem:[#allocation5 + $0x80] sm:$0xff]
    %v171 = vld [vmem:[#allocation5 + $0x88] sm:$0xff]
    %v172 = vld [vmem:[#allocation5 + $0x90] sm:$0xff]
    %v173 = vld [vmem:[#allocation5 + $0x98] sm:$0xff]
    %v174 = vld [vmem:[#allocation5 + $0xa0] sm:$0xff]
    %v175 = vld [vmem:[#allocation5 + $0xa8] sm:$0xff]
    %v176 = vld [vmem:[#allocation5 + $0xb0] sm:$0xff]
    %v177 = vld [vmem:[#allocation5 + $0xb8] sm:$0xff]
    %v178 = vld [vmem:[#allocation5 + $0xc0] sm:$0xff]
    %v179 = vld [vmem:[#allocation5 + $0xc8] sm:$0xff]
    %v180 = vld [vmem:[#allocation5 + $0xd0] sm:$0xff]
    %v181 = vld [vmem:[#allocation5 + $0xd8] sm:$0xff]
    %v182 = vld [vmem:[#allocation5 + $0xe0] sm:$0xff]
    %v183 = vld [vmem:[#allocation5 + $0xe8] sm:$0xff]
    %v184 = vld [vmem:[#allocation5 + $0xf0] sm:$0xff]
    %v185 = vld [vmem:[#allocation5 + $0xf8] sm:$0xff]
    %v186 = vld [vmem:[#allocation5 + $0x100] sm:$0xff]
    %v187 = vld [vmem:[#allocation5 + $0x108] sm:$0xff]
    %v188 = vld [vmem:[#allocation5 + $0x110] sm:$0xff]
    %v189 = vld [vmem:[#allocation5 + $0x118] sm:$0xff]
    %v190 = vld [vmem:[#allocation5 + $0x120] sm:$0xff]
    %v191 = vld [vmem:[#allocation5 + $0x128] sm:$0xff]
    %v192 = vld [vmem:[#allocation5 + $0x130] sm:$0xff]
    %v193 = vld [vmem:[#allocation5 + $0x138] sm:$0xff]
    %v194 = vld [vmem:[#allocation5 + $0x140] sm:$0xff]
    %v195 = vld [vmem:[#allocation5 + $0x148] sm:$0xff]
    %v196 = vld [vmem:[#allocation5 + $0x150] sm:$0xff]
    %v197 = vld [vmem:[#allocation5 + $0x158] sm:$0xff]
    %v198 = vld [vmem:[#allocation5 + $0x160] sm:$0xff]
    %v199 = vld [vmem:[#allocation5 + $0x168] sm:$0xff]
    %v200 = vld [vmem:[#allocation5 + $0x170] sm:$0xff]
    %v201 = vld [vmem:[#allocation5 + $0x178] sm:$0xff]
    %v202 = vld [vmem:[#allocation5 + $0x180] sm:$0xff]
    %v203 = vld [vmem:[#allocation5 + $0x188] sm:$0xff]
    %v204 = vld [vmem:[#allocation5 + $0x190] sm:$0xff]
    %v205 = vld [vmem:[#allocation5 + $0x198] sm:$0xff]
    %v206 = vld [vmem:[#allocation5 + $0x1a0] sm:$0xff]
    %v207 = vld [vmem:[#allocation5 + $0x1a8] sm:$0xff]
    %v208 = vld [vmem:[#allocation5 + $0x1b0] sm:$0xff]
    %v209 = vld [vmem:[#allocation5 + $0x1b8] sm:$0xff]
    %v210 = vld [vmem:[#allocation5 + $0x1c0] sm:$0xff]
    %v211 = vld [vmem:[#allocation5 + $0x1c8] sm:$0xff]
    %v212 = vld [vmem:[#allocation5 + $0x1d0] sm:$0xff]
    %v213 = vld [vmem:[#allocation5 + $0x1d8] sm:$0xff]
    %v214 = vld [vmem:[#allocation5 + $0x1e0] sm:$0xff]
    %v215 = vld [vmem:[#allocation5 + $0x1e8] sm:$0xff]
    %v216 = vld [vmem:[#allocation5 + $0x1f0] sm:$0xff]
    %v217 = vld [vmem:[#allocation5 + $0x1f8] sm:$0xff]
    %v218 = vld [vmem:[#allocation5 + $0x200] sm:$0xff]
    %v219 = vld [vmem:[#allocation5 + $0x208] sm:$0xff]
    %v220 = vld [vmem:[#allocation5 + $0x210] sm:$0xff]
    %v221 = vld [vmem:[#allocation5 + $0x218] sm:$0xff]
    %v222 = vld [vmem:[#allocation5 + $0x220] sm:$0xff]
    %v223 = vld [vmem:[#allocation5 + $0x228] sm:$0xff]
    %v224 = vld [vmem:[#allocation5 + $0x230] sm:$0xff]
    %v225 = vld [vmem:[#allocation5 + $0x238] sm:$0xff]
    %v226 = vld [vmem:[#allocation5 + $0x240] sm:$0xff]
    %v227 = vld [vmem:[#allocation5 + $0x248] sm:$0xff]
    %v228 = vld [vmem:[#allocation5 + $0x250] sm:$0xff]
    %v229 = vld [vmem:[#allocation5 + $0x258] sm:$0xff]
    %v230 = vld [vmem:[#allocation5 + $0x260] sm:$0xff]
    %v231 = vld [vmem:[#allocation5 + $0x268] sm:$0xff]
    %v232 = vld [vmem:[#allocation5 + $0x270] sm:$0xff]
    %v233 = vld [vmem:[#allocation5 + $0x278] sm:$0xff]
    %v234 = vld [vmem:[#allocation5 + $0x280] sm:$0xff]
    %v235 = vld [vmem:[#allocation5 + $0x288] sm:$0xff]
    %v236 = vld [vmem:[#allocation5 + $0x290] sm:$0xff]
    %v237 = vld [vmem:[#allocation5 + $0x298] sm:$0xff]
    %v238 = vld [vmem:[#allocation5 + $0x2a0] sm:$0xff]
    %v239 = vld [vmem:[#allocation5 + $0x2a8] sm:$0xff]
    %v240 = vld [vmem:[#allocation5 + $0x2b0] sm:$0xff]
    %v241 = vld [vmem:[#allocation5 + $0x2b8] sm:$0xff]
    %v242 = vld [vmem:[#allocation5 + $0x2c0] sm:$0xff]
    %v243 = vld [vmem:[#allocation5 + $0x2c8] sm:$0xff]
    %v244 = vld [vmem:[#allocation5 + $0x2d0] sm:$0xff]
    %v245 = vld [vmem:[#allocation5 + $0x2d8] sm:$0xff]
    %v246 = vld [vmem:[#allocation5 + $0x2e0] sm:$0xff]
    %v247 = vld [vmem:[#allocation5 + $0x2e8] sm:$0xff]
    %v248 = vld [vmem:[#allocation5 + $0x2f0] sm:$0xff]
    %v249 = vld [vmem:[#allocation5 + $0x2f8] sm:$0xff]
    %v250 = vld [vmem:[#allocation5 + $0x300] sm:$0xff]
    %v251 = vld [vmem:[#allocation5 + $0x308] sm:$0xff]
    %v252 = vld [vmem:[#allocation5 + $0x310] sm:$0xff]
    %v253 = vld [vmem:[#allocation5 + $0x318] sm:$0xff]
    %v254 = vld [vmem:[#allocation5 + $0x320] sm:$0xff]
    %v255 = vld [vmem:[#allocation5 + $0x328] sm:$0xff]
    %v256 = vld [vmem:[#allocation5 + $0x330] sm:$0xff]
    %v257 = vld [vmem:[#allocation5 + $0x338] sm:$0xff]
    %v258 = vld [vmem:[#allocation5 + $0x340] sm:$0xff]
    %v259 = vld [vmem:[#allocation5 + $0x348] sm:$0xff]
    %v260 = vld [vmem:[#allocation5 + $0x350] sm:$0xff]
    %v261 = vld [vmem:[#allocation5 + $0x358] sm:$0xff]
    %v262 = vld [vmem:[#allocation5 + $0x360] sm:$0xff]
    %v263 = vld [vmem:[#allocation5 + $0x368] sm:$0xff]
    %v264 = vld [vmem:[#allocation5 + $0x370] sm:$0xff]
    %v265 = vld [vmem:[#allocation5 + $0x378] sm:$0xff]
    %v266 = vld [vmem:[#allocation5 + $0x380] sm:$0xff]
    %v267 = vld [vmem:[#allocation5 + $0x388] sm:$0xff]
    %v268 = vld [vmem:[#allocation5 + $0x390] sm:$0xff]
    %v269 = vld [vmem:[#allocation5 + $0x398] sm:$0xff]
    %v270 = vld [vmem:[#allocation5 + $0x3a0] sm:$0xff]
    %v271 = vld [vmem:[#allocation5 + $0x3a8] sm:$0xff]
    %v272 = vld [vmem:[#allocation5 + $0x3b0] sm:$0xff]
    %v273 = vld [vmem:[#allocation5 + $0x3b8] sm:$0xff]
    %v274 = vld [vmem:[#allocation5 + $0x3c0] sm:$0xff]
    %v275 = vld [vmem:[#allocation5 + $0x3c8] sm:$0xff]
    %v276 = vld [vmem:[#allocation5 + $0x3d0] sm:$0xff]
    %v277 = vld [vmem:[#allocation5 + $0x3d8] sm:$0xff]
    %v278 = vld [vmem:[#allocation5 + $0x3e0] sm:$0xff]
    %v279 = vld [vmem:[#allocation5 + $0x3e8] sm:$0xff]
    %v280 = vld [vmem:[#allocation5 + $0x3f0] sm:$0xff]
    %v281 = vld [vmem:[#allocation5 + $0x3f8] sm:$0xff]
    %v282 = vld [vmem:[#allocation5 + $0x400] sm:$0xff]
    %v283 = vld [vmem:[#allocation5 + $0x408] sm:$0xff]
    %v284 = vld [vmem:[#allocation5 + $0x410] sm:$0xff]
    %v285 = vld [vmem:[#allocation5 + $0x418] sm:$0xff]
    %v286 = vld [vmem:[#allocation5 + $0x420] sm:$0xff]
    %v287 = vld [vmem:[#allocation5 + $0x428] sm:$0xff]
    %v288 = vld [vmem:[#allocation5 + $0x430] sm:$0xff]
    %v289 = vld [vmem:[#allocation5 + $0x438] sm:$0xff]
    %v290 = vld [vmem:[#allocation5 + $0x440] sm:$0xff]
    %v291 = vld [vmem:[#allocation5 + $0x448] sm:$0xff]
    %v292 = vld [vmem:[#allocation5 + $0x450] sm:$0xff]
    %v293 = vld [vmem:[#allocation5 + $0x458] sm:$0xff]
    %v294 = vld [vmem:[#allocation5 + $0x460] sm:$0xff]
    %v295 = vld [vmem:[#allocation5 + $0x468] sm:$0xff]
    %v296 = vld [vmem:[#allocation5 + $0x470] sm:$0xff]
    %v297 = vld [vmem:[#allocation5 + $0x478] sm:$0xff]
    %v298 = vld [vmem:[#allocation5 + $0x480] sm:$0xff]
    %v299 = vld [vmem:[#allocation5 + $0x488] sm:$0xff]
    %v300 = vld [vmem:[#allocation5 + $0x490] sm:$0xff]
    %v301 = vld [vmem:[#allocation5 + $0x498] sm:$0xff]
    %v302 = vld [vmem:[#allocation5 + $0x4a0] sm:$0xff]
    %v303 = vld [vmem:[#allocation5 + $0x4a8] sm:$0xff]
    %v304 = vld [vmem:[#allocation5 + $0x4b0] sm:$0xff]
    %v305 = vld [vmem:[#allocation5 + $0x4b8] sm:$0xff]
    %v306 = vld [vmem:[#allocation5 + $0x4c0] sm:$0xff]
    %v307 = vld [vmem:[#allocation5 + $0x4c8] sm:$0xff]
    %v308 = vld [vmem:[#allocation5 + $0x4d0] sm:$0xff]
    %v309 = vld [vmem:[#allocation5 + $0x4d8] sm:$0xff]
    %v310 = vld [vmem:[#allocation5 + $0x4e0] sm:$0xff]
    %v311 = vld [vmem:[#allocation5 + $0x4e8] sm:$0xff]
    %v312 = vld [vmem:[#allocation5 + $0x4f0] sm:$0xff]
    %v313 = vld [vmem:[#allocation5 + $0x4f8] sm:$0xff]
    %v314 = vld [vmem:[#allocation5 + $0x500] sm:$0xff]
    %v315 = vld [vmem:[#allocation5 + $0x508] sm:$0xff]
    %v316 = vld [vmem:[#allocation5 + $0x510] sm:$0xff]
    %v317 = vld [vmem:[#allocation5 + $0x518] sm:$0xff]
    %v318 = vld [vmem:[#allocation5 + $0x520] sm:$0xff]
    %v319 = vld [vmem:[#allocation5 + $0x528] sm:$0xff]
    %v320 = vld [vmem:[#allocation5 + $0x530] sm:$0xff]
    %v321 = vld [vmem:[#allocation5 + $0x538] sm:$0xff]
    %v322 = vld [vmem:[#allocation5 + $0x540] sm:$0xff]
    %v323 = vld [vmem:[#allocation5 + $0x548] sm:$0xff]
    %v324 = vld [vmem:[#allocation5 + $0x550] sm:$0xff]
    %v325 = vld [vmem:[#allocation5 + $0x558] sm:$0xff]
    %v326 = vld [vmem:[#allocation5 + $0x560] sm:$0xff]
    %v327 = vld [vmem:[#allocation5 + $0x568] sm:$0xff]
    %v328 = vld [vmem:[#allocation5 + $0x570] sm:$0xff]
    %v329 = vld [vmem:[#allocation5 + $0x578] sm:$0xff]
    %v330 = vld [vmem:[#allocation5 + $0x580] sm:$0xff]
    %v331 = vld [vmem:[#allocation5 + $0x588] sm:$0xff]
    %v332 = vld [vmem:[#allocation5 + $0x590] sm:$0xff]
    %v333 = vld [vmem:[#allocation5 + $0x598] sm:$0xff]
    %v334 = vld [vmem:[#allocation5 + $0x5a0] sm:$0xff]
    %v335 = vld [vmem:[#allocation5 + $0x5a8] sm:$0xff]
    %v336 = vld [vmem:[#allocation5 + $0x5b0] sm:$0xff]
    %v337 = vld [vmem:[#allocation5 + $0x5b8] sm:$0xff]
    %v338 = vld [vmem:[#allocation5 + $0x5c0] sm:$0xff]
    %v339 = vld [vmem:[#allocation5 + $0x5c8] sm:$0xff]
    %v340 = vld [vmem:[#allocation5 + $0x5d0] sm:$0xff]
    %v341 = vld [vmem:[#allocation5 + $0x5d8] sm:$0xff]
    %v342 = vld [vmem:[#allocation5 + $0x5e0] sm:$0xff]
    %v343 = vld [vmem:[#allocation5 + $0x5e8] sm:$0xff]
    %v344 = vld [vmem:[#allocation5 + $0x5f0] sm:$0xff]
    %v345 = vld [vmem:[#allocation5 + $0x5f8] sm:$0xff]
    %v346 = vld [vmem:[#allocation5 + $0x600] sm:$0xff]
    %v347 = vld [vmem:[#allocation5 + $0x608] sm:$0xff]
    %v348 = vld [vmem:[#allocation5 + $0x610] sm:$0xff]
    %v349 = vld [vmem:[#allocation5 + $0x618] sm:$0xff]
    %v350 = vld [vmem:[#allocation5 + $0x620] sm:$0xff]
    %v351 = vld [vmem:[#allocation5 + $0x628] sm:$0xff]
    %v352 = vld [vmem:[#allocation5 + $0x630] sm:$0xff]
    %v353 = vld [vmem:[#allocation5 + $0x638] sm:$0xff]
    %v354 = vld [vmem:[#allocation5 + $0x640] sm:$0xff]
    %v355 = vld [vmem:[#allocation5 + $0x648] sm:$0xff]
    %v356 = vld [vmem:[#allocation5 + $0x650] sm:$0xff]
    %v357 = vld [vmem:[#allocation5 + $0x658] sm:$0xff]
    %v358 = vld [vmem:[#allocation5 + $0x660] sm:$0xff]
    %v359 = vld [vmem:[#allocation5 + $0x668] sm:$0xff]
    %v360 = vld [vmem:[#allocation5 + $0x670] sm:$0xff]
    %v361 = vld [vmem:[#allocation5 + $0x678] sm:$0xff]
    %v362 = vld [vmem:[#allocation5 + $0x680] sm:$0xff]
    %v363 = vld [vmem:[#allocation5 + $0x688] sm:$0xff]
    %v364 = vld [vmem:[#allocation5 + $0x690] sm:$0xff]
    %v365 = vld [vmem:[#allocation5 + $0x698] sm:$0xff]
    %v366 = vld [vmem:[#allocation5 + $0x6a0] sm:$0xff]
    %v367 = vld [vmem:[#allocation5 + $0x6a8] sm:$0xff]
    %v368 = vld [vmem:[#allocation5 + $0x6b0] sm:$0xff]
    %v369 = vld [vmem:[#allocation5 + $0x6b8] sm:$0xff]
    %v370 = vld [vmem:[#allocation5 + $0x6c0] sm:$0xff]
    %v371 = vld [vmem:[#allocation5 + $0x6c8] sm:$0xff]
    %v372 = vld [vmem:[#allocation5 + $0x6d0] sm:$0xff]
    %v373 = vld [vmem:[#allocation5 + $0x6d8] sm:$0xff]
    %v374 = vld [vmem:[#allocation5 + $0x6e0] sm:$0xff]
    %v375 = vld [vmem:[#allocation5 + $0x6e8] sm:$0xff]
    %v376 = vld [vmem:[#allocation5 + $0x6f0] sm:$0xff]
    %v377 = vld [vmem:[#allocation5 + $0x6f8] sm:$0xff]
    %v378 = vld [vmem:[#allocation5 + $0x700] sm:$0xff]
    %v379 = vld [vmem:[#allocation5 + $0x708] sm:$0xff]
    %v380 = vld [vmem:[#allocation5 + $0x710] sm:$0xff]
    %v381 = vld [vmem:[#allocation5 + $0x718] sm:$0xff]
    %v382 = vld [vmem:[#allocation5 + $0x720] sm:$0xff]
    %v383 = vld [vmem:[#allocation5 + $0x728] sm:$0xff]
    %v384 = vld [vmem:[#allocation5 + $0x730] sm:$0xff]
    %v385 = vld [vmem:[#allocation5 + $0x738] sm:$0xff]
    %v386 = vld [vmem:[#allocation5 + $0x740] sm:$0xff]
    %v387 = vld [vmem:[#allocation5 + $0x748] sm:$0xff]
    %v388 = vld [vmem:[#allocation5 + $0x750] sm:$0xff]
    %v389 = vld [vmem:[#allocation5 + $0x758] sm:$0xff]
    %v390 = vld [vmem:[#allocation5 + $0x760] sm:$0xff]
    %v391 = vld [vmem:[#allocation5 + $0x768] sm:$0xff]
    %v392 = vld [vmem:[#allocation5 + $0x770] sm:$0xff]
    %v393 = vld [vmem:[#allocation5 + $0x778] sm:$0xff]
    %v394 = vld [vmem:[#allocation5 + $0x780] sm:$0xff]
    %v395 = vld [vmem:[#allocation5 + $0x788] sm:$0xff]
    %v396 = vld [vmem:[#allocation5 + $0x790] sm:$0xff]
    %v397 = vld [vmem:[#allocation5 + $0x798] sm:$0xff]
    %v398 = vld [vmem:[#allocation5 + $0x7a0] sm:$0xff]
    %v399 = vld [vmem:[#allocation5 + $0x7a8] sm:$0xff]
    %v400 = vld [vmem:[#allocation5 + $0x7b0] sm:$0xff]
    %v401 = vld [vmem:[#allocation5 + $0x7b8] sm:$0xff]
    %v402 = vld [vmem:[#allocation5 + $0x7c0] sm:$0xff]
    %v403 = vld [vmem:[#allocation5 + $0x7c8] sm:$0xff]
    %v404 = vld [vmem:[#allocation5 + $0x7d0] sm:$0xff]
    %v405 = vld [vmem:[#allocation5 + $0x7d8] sm:$0xff]
    %v406 = vld [vmem:[#allocation5 + $0x7e0] sm:$0xff]
    %v407 = vld [vmem:[#allocation5 + $0x7e8] sm:$0xff]
    %v408 = vld [vmem:[#allocation5 + $0x7f0] sm:$0xff]
    %v409 = vld [vmem:[#allocation5 + $0x7f8] sm:$0xff]
    %v410 = vld [vmem:[#allocation7] sm:$0xf]
    %v412 = vperm.slane %v410, 0
    %v413 = vperm.slane %v410, 1
    %v414 = vperm.slane %v410, 2
    %v415 = vperm.slane %v410, 3
    %v676 = vunpack.c.l.b16 %v154
    %v677 = vunpack.c.h.b16 %v154
    %v678 = vunpack.c.l.b16 %v155
    %v679 = vunpack.c.h.b16 %v155
    %v680 = vunpack.c.l.b16 %v156
    %v681 = vunpack.c.h.b16 %v156
    %v682 = vunpack.c.l.b16 %v157
    %v683 = vunpack.c.h.b16 %v157
    %v684 = vunpack.c.l.b16 %v158
    %v685 = vunpack.c.h.b16 %v158
    %v686 = vunpack.c.l.b16 %v159
    %v687 = vunpack.c.h.b16 %v159
    %v688 = vunpack.c.l.b16 %v160
    %v689 = vunpack.c.h.b16 %v160
    %v690 = vunpack.c.l.b16 %v161
    %v691 = vunpack.c.h.b16 %v161
    %v692 = vunpack.c.l.b16 %v162
    %v693 = vunpack.c.h.b16 %v162
    %v694 = vunpack.c.l.b16 %v163
    %v695 = vunpack.c.h.b16 %v163
    %v696 = vunpack.c.l.b16 %v164
    %v697 = vunpack.c.h.b16 %v164
    %v698 = vunpack.c.l.b16 %v165
    %v699 = vunpack.c.h.b16 %v165
    %v700 = vunpack.c.l.b16 %v166
    %v701 = vunpack.c.h.b16 %v166
    %v702 = vunpack.c.l.b16 %v167
    %v703 = vunpack.c.h.b16 %v167
    %v704 = vunpack.c.l.b16 %v168
    %v705 = vunpack.c.h.b16 %v168
    %v706 = vunpack.c.l.b16 %v169
    %v707 = vunpack.c.h.b16 %v169
    %v708 = vunpack.c.l.b16 %v170
    %v709 = vunpack.c.h.b16 %v170
    %v710 = vunpack.c.l.b16 %v171
    %v711 = vunpack.c.h.b16 %v171
    %v712 = vunpack.c.l.b16 %v172
    %v713 = vunpack.c.h.b16 %v172
    %v714 = vunpack.c.l.b16 %v173
    %v715 = vunpack.c.h.b16 %v173
    %v716 = vunpack.c.l.b16 %v174
    %v717 = vunpack.c.h.b16 %v174
    %v718 = vunpack.c.l.b16 %v175
    %v719 = vunpack.c.h.b16 %v175
    %v720 = vunpack.c.l.b16 %v176
    %v721 = vunpack.c.h.b16 %v176
    %v722 = vunpack.c.l.b16 %v177
    %v723 = vunpack.c.h.b16 %v177
    %v724 = vunpack.c.l.b16 %v178
    %v725 = vunpack.c.h.b16 %v178
    %v726 = vunpack.c.l.b16 %v179
    %v727 = vunpack.c.h.b16 %v179
    %v728 = vunpack.c.l.b16 %v180
    %v729 = vunpack.c.h.b16 %v180
    %v730 = vunpack.c.l.b16 %v181
    %v731 = vunpack.c.h.b16 %v181
    %v732 = vunpack.c.l.b16 %v182
    %v733 = vunpack.c.h.b16 %v182
    %v734 = vunpack.c.l.b16 %v183
    %v735 = vunpack.c.h.b16 %v183
    %v736 = vunpack.c.l.b16 %v184
    %v737 = vunpack.c.h.b16 %v184
    %v738 = vunpack.c.l.b16 %v185
    %v739 = vunpack.c.h.b16 %v185
    %v740 = vunpack.c.l.b16 %v186
    %v741 = vunpack.c.h.b16 %v186
    %v742 = vunpack.c.l.b16 %v187
    %v743 = vunpack.c.h.b16 %v187
    %v744 = vunpack.c.l.b16 %v188
    %v745 = vunpack.c.h.b16 %v188
    %v746 = vunpack.c.l.b16 %v189
    %v747 = vunpack.c.h.b16 %v189
    %v748 = vunpack.c.l.b16 %v190
    %v749 = vunpack.c.h.b16 %v190
    %v750 = vunpack.c.l.b16 %v191
    %v751 = vunpack.c.h.b16 %v191
    %v752 = vunpack.c.l.b16 %v192
    %v753 = vunpack.c.h.b16 %v192
    %v754 = vunpack.c.l.b16 %v193
    %v755 = vunpack.c.h.b16 %v193
    %v756 = vunpack.c.l.b16 %v194
    %v757 = vunpack.c.h.b16 %v194
    %v758 = vunpack.c.l.b16 %v195
    %v759 = vunpack.c.h.b16 %v195
    %v760 = vunpack.c.l.b16 %v196
    %v761 = vunpack.c.h.b16 %v196
    %v762 = vunpack.c.l.b16 %v197
    %v763 = vunpack.c.h.b16 %v197
    %v764 = vunpack.c.l.b16 %v198
    %v765 = vunpack.c.h.b16 %v198
    %v766 = vunpack.c.l.b16 %v199
    %v767 = vunpack.c.h.b16 %v199
    %v768 = vunpack.c.l.b16 %v200
    %v769 = vunpack.c.h.b16 %v200
    %v770 = vunpack.c.l.b16 %v201
    %v771 = vunpack.c.h.b16 %v201
    %v772 = vunpack.c.l.b16 %v202
    %v773 = vunpack.c.h.b16 %v202
    %v774 = vunpack.c.l.b16 %v203
    %v775 = vunpack.c.h.b16 %v203
    %v776 = vunpack.c.l.b16 %v204
    %v777 = vunpack.c.h.b16 %v204
    %v778 = vunpack.c.l.b16 %v205
    %v779 = vunpack.c.h.b16 %v205
    %v780 = vunpack.c.l.b16 %v206
    %v781 = vunpack.c.h.b16 %v206
    %v782 = vunpack.c.l.b16 %v207
    %v783 = vunpack.c.h.b16 %v207
    %v784 = vunpack.c.l.b16 %v208
    %v785 = vunpack.c.h.b16 %v208
    %v786 = vunpack.c.l.b16 %v209
    %v787 = vunpack.c.h.b16 %v209
    %v788 = vunpack.c.l.b16 %v210
    %v789 = vunpack.c.h.b16 %v210
    %v790 = vunpack.c.l.b16 %v211
    %v791 = vunpack.c.h.b16 %v211
    %v792 = vunpack.c.l.b16 %v212
    %v793 = vunpack.c.h.b16 %v212
    %v794 = vunpack.c.l.b16 %v213
    %v795 = vunpack.c.h.b16 %v213
    %v796 = vunpack.c.l.b16 %v214
    %v797 = vunpack.c.h.b16 %v214
    %v798 = vunpack.c.l.b16 %v215
    %v799 = vunpack.c.h.b16 %v215
    %v800 = vunpack.c.l.b16 %v216
    %v801 = vunpack.c.h.b16 %v216
    %v802 = vunpack.c.l.b16 %v217
    %v803 = vunpack.c.h.b16 %v217
    %v804 = vunpack.c.l.b16 %v218
    %v805 = vunpack.c.h.b16 %v218
    %v806 = vunpack.c.l.b16 %v219
    %v807 = vunpack.c.h.b16 %v219
    %v808 = vunpack.c.l.b16 %v220
    %v809 = vunpack.c.h.b16 %v220
    %v810 = vunpack.c.l.b16 %v221
    %v811 = vunpack.c.h.b16 %v221
    %v812 = vunpack.c.l.b16 %v222
    %v813 = vunpack.c.h.b16 %v222
    %v814 = vunpack.c.l.b16 %v223
    %v815 = vunpack.c.h.b16 %v223
    %v816 = vunpack.c.l.b16 %v224
    %v817 = vunpack.c.h.b16 %v224
    %v818 = vunpack.c.l.b16 %v225
    %v819 = vunpack.c.h.b16 %v225
    %v820 = vunpack.c.l.b16 %v226
    %v821 = vunpack.c.h.b16 %v226
    %v822 = vunpack.c.l.b16 %v227
    %v823 = vunpack.c.h.b16 %v227
    %v824 = vunpack.c.l.b16 %v228
    %v825 = vunpack.c.h.b16 %v228
    %v826 = vunpack.c.l.b16 %v229
    %v827 = vunpack.c.h.b16 %v229
    %v828 = vunpack.c.l.b16 %v230
    %v829 = vunpack.c.h.b16 %v230
    %v830 = vunpack.c.l.b16 %v231
    %v831 = vunpack.c.h.b16 %v231
    %v832 = vunpack.c.l.b16 %v232
    %v833 = vunpack.c.h.b16 %v232
    %v834 = vunpack.c.l.b16 %v233
    %v835 = vunpack.c.h.b16 %v233
    %v836 = vunpack.c.l.b16 %v234
    %v837 = vunpack.c.h.b16 %v234
    %v838 = vunpack.c.l.b16 %v235
    %v839 = vunpack.c.h.b16 %v235
    %v840 = vunpack.c.l.b16 %v236
    %v841 = vunpack.c.h.b16 %v236
    %v842 = vunpack.c.l.b16 %v237
    %v843 = vunpack.c.h.b16 %v237
    %v844 = vunpack.c.l.b16 %v238
    %v845 = vunpack.c.h.b16 %v238
    %v846 = vunpack.c.l.b16 %v239
    %v847 = vunpack.c.h.b16 %v239
    %v848 = vunpack.c.l.b16 %v240
    %v849 = vunpack.c.h.b16 %v240
    %v850 = vunpack.c.l.b16 %v241
    %v851 = vunpack.c.h.b16 %v241
    %v852 = vunpack.c.l.b16 %v242
    %v853 = vunpack.c.h.b16 %v242
    %v854 = vunpack.c.l.b16 %v243
    %v855 = vunpack.c.h.b16 %v243
    %v856 = vunpack.c.l.b16 %v244
    %v857 = vunpack.c.h.b16 %v244
    %v858 = vunpack.c.l.b16 %v245
    %v859 = vunpack.c.h.b16 %v245
    %v860 = vunpack.c.l.b16 %v246
    %v861 = vunpack.c.h.b16 %v246
    %v862 = vunpack.c.l.b16 %v247
    %v863 = vunpack.c.h.b16 %v247
    %v864 = vunpack.c.l.b16 %v248
    %v865 = vunpack.c.h.b16 %v248
    %v866 = vunpack.c.l.b16 %v249
    %v867 = vunpack.c.h.b16 %v249
    %v868 = vunpack.c.l.b16 %v250
    %v869 = vunpack.c.h.b16 %v250
    %v870 = vunpack.c.l.b16 %v251
    %v871 = vunpack.c.h.b16 %v251
    %v872 = vunpack.c.l.b16 %v252
    %v873 = vunpack.c.h.b16 %v252
    %v874 = vunpack.c.l.b16 %v253
    %v875 = vunpack.c.h.b16 %v253
    %v876 = vunpack.c.l.b16 %v254
    %v877 = vunpack.c.h.b16 %v254
    %v878 = vunpack.c.l.b16 %v255
    %v879 = vunpack.c.h.b16 %v255
    %v880 = vunpack.c.l.b16 %v256
    %v881 = vunpack.c.h.b16 %v256
    %v882 = vunpack.c.l.b16 %v257
    %v883 = vunpack.c.h.b16 %v257
    %v884 = vunpack.c.l.b16 %v258
    %v885 = vunpack.c.h.b16 %v258
    %v886 = vunpack.c.l.b16 %v259
    %v887 = vunpack.c.h.b16 %v259
    %v888 = vunpack.c.l.b16 %v260
    %v889 = vunpack.c.h.b16 %v260
    %v890 = vunpack.c.l.b16 %v261
    %v891 = vunpack.c.h.b16 %v261
    %v892 = vunpack.c.l.b16 %v262
    %v893 = vunpack.c.h.b16 %v262
    %v894 = vunpack.c.l.b16 %v263
    %v895 = vunpack.c.h.b16 %v263
    %v896 = vunpack.c.l.b16 %v264
    %v897 = vunpack.c.h.b16 %v264
    %v898 = vunpack.c.l.b16 %v265
    %v899 = vunpack.c.h.b16 %v265
    %v900 = vunpack.c.l.b16 %v266
    %v901 = vunpack.c.h.b16 %v266
    %v902 = vunpack.c.l.b16 %v267
    %v903 = vunpack.c.h.b16 %v267
    %v904 = vunpack.c.l.b16 %v268
    %v905 = vunpack.c.h.b16 %v268
    %v906 = vunpack.c.l.b16 %v269
    %v907 = vunpack.c.h.b16 %v269
    %v908 = vunpack.c.l.b16 %v270
    %v909 = vunpack.c.h.b16 %v270
    %v910 = vunpack.c.l.b16 %v271
    %v911 = vunpack.c.h.b16 %v271
    %v912 = vunpack.c.l.b16 %v272
    %v913 = vunpack.c.h.b16 %v272
    %v914 = vunpack.c.l.b16 %v273
    %v915 = vunpack.c.h.b16 %v273
    %v916 = vunpack.c.l.b16 %v274
    %v917 = vunpack.c.h.b16 %v274
    %v918 = vunpack.c.l.b16 %v275
    %v919 = vunpack.c.h.b16 %v275
    %v920 = vunpack.c.l.b16 %v276
    %v921 = vunpack.c.h.b16 %v276
    %v922 = vunpack.c.l.b16 %v277
    %v923 = vunpack.c.h.b16 %v277
    %v924 = vunpack.c.l.b16 %v278
    %v925 = vunpack.c.h.b16 %v278
    %v926 = vunpack.c.l.b16 %v279
    %v927 = vunpack.c.h.b16 %v279
    %v928 = vunpack.c.l.b16 %v280
    %v929 = vunpack.c.h.b16 %v280
    %v930 = vunpack.c.l.b16 %v281
    %v931 = vunpack.c.h.b16 %v281
    %v932 = vunpack.c.l.b16 %v282
    %v933 = vunpack.c.h.b16 %v282
    %v934 = vunpack.c.l.b16 %v283
    %v935 = vunpack.c.h.b16 %v283
    %v936 = vunpack.c.l.b16 %v284
    %v937 = vunpack.c.h.b16 %v284
    %v938 = vunpack.c.l.b16 %v285
    %v939 = vunpack.c.h.b16 %v285
    %v940 = vunpack.c.l.b16 %v286
    %v941 = vunpack.c.h.b16 %v286
    %v942 = vunpack.c.l.b16 %v287
    %v943 = vunpack.c.h.b16 %v287
    %v944 = vunpack.c.l.b16 %v288
    %v945 = vunpack.c.h.b16 %v288
    %v946 = vunpack.c.l.b16 %v289
    %v947 = vunpack.c.h.b16 %v289
    %v948 = vunpack.c.l.b16 %v290
    %v949 = vunpack.c.h.b16 %v290
    %v950 = vunpack.c.l.b16 %v291
    %v951 = vunpack.c.h.b16 %v291
    %v952 = vunpack.c.l.b16 %v292
    %v953 = vunpack.c.h.b16 %v292
    %v954 = vunpack.c.l.b16 %v293
    %v955 = vunpack.c.h.b16 %v293
    %v956 = vunpack.c.l.b16 %v294
    %v957 = vunpack.c.h.b16 %v294
    %v958 = vunpack.c.l.b16 %v295
    %v959 = vunpack.c.h.b16 %v295
    %v960 = vunpack.c.l.b16 %v296
    %v961 = vunpack.c.h.b16 %v296
    %v962 = vunpack.c.l.b16 %v297
    %v963 = vunpack.c.h.b16 %v297
    %v964 = vunpack.c.l.b16 %v298
    %v965 = vunpack.c.h.b16 %v298
    %v966 = vunpack.c.l.b16 %v299
    %v967 = vunpack.c.h.b16 %v299
    %v968 = vunpack.c.l.b16 %v300
    %v969 = vunpack.c.h.b16 %v300
    %v970 = vunpack.c.l.b16 %v301
    %v971 = vunpack.c.h.b16 %v301
    %v972 = vunpack.c.l.b16 %v302
    %v973 = vunpack.c.h.b16 %v302
    %v974 = vunpack.c.l.b16 %v303
    %v975 = vunpack.c.h.b16 %v303
    %v976 = vunpack.c.l.b16 %v304
    %v977 = vunpack.c.h.b16 %v304
    %v978 = vunpack.c.l.b16 %v305
    %v979 = vunpack.c.h.b16 %v305
    %v980 = vunpack.c.l.b16 %v306
    %v981 = vunpack.c.h.b16 %v306
    %v982 = vunpack.c.l.b16 %v307
    %v983 = vunpack.c.h.b16 %v307
    %v984 = vunpack.c.l.b16 %v308
    %v985 = vunpack.c.h.b16 %v308
    %v986 = vunpack.c.l.b16 %v309
    %v987 = vunpack.c.h.b16 %v309
    %v988 = vunpack.c.l.b16 %v310
    %v989 = vunpack.c.h.b16 %v310
    %v990 = vunpack.c.l.b16 %v311
    %v991 = vunpack.c.h.b16 %v311
    %v992 = vunpack.c.l.b16 %v312
    %v993 = vunpack.c.h.b16 %v312
    %v994 = vunpack.c.l.b16 %v313
    %v995 = vunpack.c.h.b16 %v313
    %v996 = vunpack.c.l.b16 %v314
    %v997 = vunpack.c.h.b16 %v314
    %v998 = vunpack.c.l.b16 %v315
    %v999 = vunpack.c.h.b16 %v315
    %v1000 = vunpack.c.l.b16 %v316
    %v1001 = vunpack.c.h.b16 %v316
    %v1002 = vunpack.c.l.b16 %v317
    %v1003 = vunpack.c.h.b16 %v317
    %v1004 = vunpack.c.l.b16 %v318
    %v1005 = vunpack.c.h.b16 %v318
    %v1006 = vunpack.c.l.b16 %v319
    %v1007 = vunpack.c.h.b16 %v319
    %v1008 = vunpack.c.l.b16 %v320
    %v1009 = vunpack.c.h.b16 %v320
    %v1010 = vunpack.c.l.b16 %v321
    %v1011 = vunpack.c.h.b16 %v321
    %v1012 = vunpack.c.l.b16 %v322
    %v1013 = vunpack.c.h.b16 %v322
    %v1014 = vunpack.c.l.b16 %v323
    %v1015 = vunpack.c.h.b16 %v323
    %v1016 = vunpack.c.l.b16 %v324
    %v1017 = vunpack.c.h.b16 %v324
    %v1018 = vunpack.c.l.b16 %v325
    %v1019 = vunpack.c.h.b16 %v325
    %v1020 = vunpack.c.l.b16 %v326
    %v1021 = vunpack.c.h.b16 %v326
    %v1022 = vunpack.c.l.b16 %v327
    %v1023 = vunpack.c.h.b16 %v327
    %v1024 = vunpack.c.l.b16 %v328
    %v1025 = vunpack.c.h.b16 %v328
    %v1026 = vunpack.c.l.b16 %v329
    %v1027 = vunpack.c.h.b16 %v329
    %v1028 = vunpack.c.l.b16 %v330
    %v1029 = vunpack.c.h.b16 %v330
    %v1030 = vunpack.c.l.b16 %v331
    %v1031 = vunpack.c.h.b16 %v331
    %v1032 = vunpack.c.l.b16 %v332
    %v1033 = vunpack.c.h.b16 %v332
    %v1034 = vunpack.c.l.b16 %v333
    %v1035 = vunpack.c.h.b16 %v333
    %v1036 = vunpack.c.l.b16 %v334
    %v1037 = vunpack.c.h.b16 %v334
    %v1038 = vunpack.c.l.b16 %v335
    %v1039 = vunpack.c.h.b16 %v335
    %v1040 = vunpack.c.l.b16 %v336
    %v1041 = vunpack.c.h.b16 %v336
    %v1042 = vunpack.c.l.b16 %v337
    %v1043 = vunpack.c.h.b16 %v337
    %v1044 = vunpack.c.l.b16 %v338
    %v1045 = vunpack.c.h.b16 %v338
    %v1046 = vunpack.c.l.b16 %v339
    %v1047 = vunpack.c.h.b16 %v339
    %v1048 = vunpack.c.l.b16 %v340
    %v1049 = vunpack.c.h.b16 %v340
    %v1050 = vunpack.c.l.b16 %v341
    %v1051 = vunpack.c.h.b16 %v341
    %v1052 = vunpack.c.l.b16 %v342
    %v1053 = vunpack.c.h.b16 %v342
    %v1054 = vunpack.c.l.b16 %v343
    %v1055 = vunpack.c.h.b16 %v343
    %v1056 = vunpack.c.l.b16 %v344
    %v1057 = vunpack.c.h.b16 %v344
    %v1058 = vunpack.c.l.b16 %v345
    %v1059 = vunpack.c.h.b16 %v345
    %v1060 = vunpack.c.l.b16 %v346
    %v1061 = vunpack.c.h.b16 %v346
    %v1062 = vunpack.c.l.b16 %v347
    %v1063 = vunpack.c.h.b16 %v347
    %v1064 = vunpack.c.l.b16 %v348
    %v1065 = vunpack.c.h.b16 %v348
    %v1066 = vunpack.c.l.b16 %v349
    %v1067 = vunpack.c.h.b16 %v349
    %v1068 = vunpack.c.l.b16 %v350
    %v1069 = vunpack.c.h.b16 %v350
    %v1070 = vunpack.c.l.b16 %v351
    %v1071 = vunpack.c.h.b16 %v351
    %v1072 = vunpack.c.l.b16 %v352
    %v1073 = vunpack.c.h.b16 %v352
    %v1074 = vunpack.c.l.b16 %v353
    %v1075 = vunpack.c.h.b16 %v353
    %v1076 = vunpack.c.l.b16 %v354
    %v1077 = vunpack.c.h.b16 %v354
    %v1078 = vunpack.c.l.b16 %v355
    %v1079 = vunpack.c.h.b16 %v355
    %v1080 = vunpack.c.l.b16 %v356
    %v1081 = vunpack.c.h.b16 %v356
    %v1082 = vunpack.c.l.b16 %v357
    %v1083 = vunpack.c.h.b16 %v357
    %v1084 = vunpack.c.l.b16 %v358
    %v1085 = vunpack.c.h.b16 %v358
    %v1086 = vunpack.c.l.b16 %v359
    %v1087 = vunpack.c.h.b16 %v359
    %v1088 = vunpack.c.l.b16 %v360
    %v1089 = vunpack.c.h.b16 %v360
    %v1090 = vunpack.c.l.b16 %v361
    %v1091 = vunpack.c.h.b16 %v361
    %v1092 = vunpack.c.l.b16 %v362
    %v1093 = vunpack.c.h.b16 %v362
    %v1094 = vunpack.c.l.b16 %v363
    %v1095 = vunpack.c.h.b16 %v363
    %v1096 = vunpack.c.l.b16 %v364
    %v1097 = vunpack.c.h.b16 %v364
    %v1098 = vunpack.c.l.b16 %v365
    %v1099 = vunpack.c.h.b16 %v365
    %v1100 = vunpack.c.l.b16 %v366
    %v1101 = vunpack.c.h.b16 %v366
    %v1102 = vunpack.c.l.b16 %v367
    %v1103 = vunpack.c.h.b16 %v367
    %v1104 = vunpack.c.l.b16 %v368
    %v1105 = vunpack.c.h.b16 %v368
    %v1106 = vunpack.c.l.b16 %v369
    %v1107 = vunpack.c.h.b16 %v369
    %v1108 = vunpack.c.l.b16 %v370
    %v1109 = vunpack.c.h.b16 %v370
    %v1110 = vunpack.c.l.b16 %v371
    %v1111 = vunpack.c.h.b16 %v371
    %v1112 = vunpack.c.l.b16 %v372
    %v1113 = vunpack.c.h.b16 %v372
    %v1114 = vunpack.c.l.b16 %v373
    %v1115 = vunpack.c.h.b16 %v373
    %v1116 = vunpack.c.l.b16 %v374
    %v1117 = vunpack.c.h.b16 %v374
    %v1118 = vunpack.c.l.b16 %v375
    %v1119 = vunpack.c.h.b16 %v375
    %v1120 = vunpack.c.l.b16 %v376
    %v1121 = vunpack.c.h.b16 %v376
    %v1122 = vunpack.c.l.b16 %v377
    %v1123 = vunpack.c.h.b16 %v377
    %v1124 = vunpack.c.l.b16 %v378
    %v1125 = vunpack.c.h.b16 %v378
    %v1126 = vunpack.c.l.b16 %v379
    %v1127 = vunpack.c.h.b16 %v379
    %v1128 = vunpack.c.l.b16 %v380
    %v1129 = vunpack.c.h.b16 %v380
    %v1130 = vunpack.c.l.b16 %v381
    %v1131 = vunpack.c.h.b16 %v381
    %v1132 = vunpack.c.l.b16 %v382
    %v1133 = vunpack.c.h.b16 %v382
    %v1134 = vunpack.c.l.b16 %v383
    %v1135 = vunpack.c.h.b16 %v383
    %v1136 = vunpack.c.l.b16 %v384
    %v1137 = vunpack.c.h.b16 %v384
    %v1138 = vunpack.c.l.b16 %v385
    %v1139 = vunpack.c.h.b16 %v385
    %v1140 = vunpack.c.l.b16 %v386
    %v1141 = vunpack.c.h.b16 %v386
    %v1142 = vunpack.c.l.b16 %v387
    %v1143 = vunpack.c.h.b16 %v387
    %v1144 = vunpack.c.l.b16 %v388
    %v1145 = vunpack.c.h.b16 %v388
    %v1146 = vunpack.c.l.b16 %v389
    %v1147 = vunpack.c.h.b16 %v389
    %v1148 = vunpack.c.l.b16 %v390
    %v1149 = vunpack.c.h.b16 %v390
    %v1150 = vunpack.c.l.b16 %v391
    %v1151 = vunpack.c.h.b16 %v391
    %v1152 = vunpack.c.l.b16 %v392
    %v1153 = vunpack.c.h.b16 %v392
    %v1154 = vunpack.c.l.b16 %v393
    %v1155 = vunpack.c.h.b16 %v393
    %v1156 = vunpack.c.l.b16 %v394
    %v1157 = vunpack.c.h.b16 %v394
    %v1158 = vunpack.c.l.b16 %v395
    %v1159 = vunpack.c.h.b16 %v395
    %v1160 = vunpack.c.l.b16 %v396
    %v1161 = vunpack.c.h.b16 %v396
    %v1162 = vunpack.c.l.b16 %v397
    %v1163 = vunpack.c.h.b16 %v397
    %v1164 = vunpack.c.l.b16 %v398
    %v1165 = vunpack.c.h.b16 %v398
    %v1166 = vunpack.c.l.b16 %v399
    %v1167 = vunpack.c.h.b16 %v399
    %v1168 = vunpack.c.l.b16 %v400
    %v1169 = vunpack.c.h.b16 %v400
    %v1170 = vunpack.c.l.b16 %v401
    %v1171 = vunpack.c.h.b16 %v401
    %v1172 = vunpack.c.l.b16 %v402
    %v1173 = vunpack.c.h.b16 %v402
    %v1174 = vunpack.c.l.b16 %v403
    %v1175 = vunpack.c.h.b16 %v403
    %v1176 = vunpack.c.l.b16 %v404
    %v1177 = vunpack.c.h.b16 %v404
    %v1178 = vunpack.c.l.b16 %v405
    %v1179 = vunpack.c.h.b16 %v405
    %v1180 = vunpack.c.l.b16 %v406
    %v1181 = vunpack.c.h.b16 %v406
    %v1182 = vunpack.c.l.b16 %v407
    %v1183 = vunpack.c.h.b16 %v407
    %v1184 = vunpack.c.l.b16 %v408
    %v1185 = vunpack.c.h.b16 %v408
    %v1186 = vunpack.c.l.b16 %v409
    %v1187 = vunpack.c.h.b16 %v409
    %v1188 = vpack.c.b16 %v680, %v676
    %v1189 = vpack.c.b16 %v681, %v677
    %v1190 = vpack.c.b16 %v682, %v678
    %v1191 = vpack.c.b16 %v683, %v679
    %v1192 = vpack.c.b16 %v688, %v684
    %v1193 = vpack.c.b16 %v689, %v685
    %v1194 = vpack.c.b16 %v690, %v686
    %v1195 = vpack.c.b16 %v691, %v687
    %v1196 = vpack.c.b16 %v696, %v692
    %v1197 = vpack.c.b16 %v697, %v693
    %v1198 = vpack.c.b16 %v698, %v694
    %v1199 = vpack.c.b16 %v699, %v695
    %v1200 = vpack.c.b16 %v704, %v700
    %v1201 = vpack.c.b16 %v705, %v701
    %v1202 = vpack.c.b16 %v706, %v702
    %v1203 = vpack.c.b16 %v707, %v703
    %v1204 = vpack.c.b16 %v712, %v708
    %v1205 = vpack.c.b16 %v713, %v709
    %v1206 = vpack.c.b16 %v714, %v710
    %v1207 = vpack.c.b16 %v715, %v711
    %v1208 = vpack.c.b16 %v720, %v716
    %v1209 = vpack.c.b16 %v721, %v717
    %v1210 = vpack.c.b16 %v722, %v718
    %v1211 = vpack.c.b16 %v723, %v719
    %v1212 = vpack.c.b16 %v728, %v724
    %v1213 = vpack.c.b16 %v729, %v725
    %v1214 = vpack.c.b16 %v730, %v726
    %v1215 = vpack.c.b16 %v731, %v727
    %v1216 = vpack.c.b16 %v736, %v732
    %v1217 = vpack.c.b16 %v737, %v733
    %v1218 = vpack.c.b16 %v738, %v734
    %v1219 = vpack.c.b16 %v739, %v735
    %v1220 = vpack.c.b16 %v744, %v740
    %v1221 = vpack.c.b16 %v745, %v741
    %v1222 = vpack.c.b16 %v746, %v742
    %v1223 = vpack.c.b16 %v747, %v743
    %v1224 = vpack.c.b16 %v752, %v748
    %v1225 = vpack.c.b16 %v753, %v749
    %v1226 = vpack.c.b16 %v754, %v750
    %v1227 = vpack.c.b16 %v755, %v751
    %v1228 = vpack.c.b16 %v760, %v756
    %v1229 = vpack.c.b16 %v761, %v757
    %v1230 = vpack.c.b16 %v762, %v758
    %v1231 = vpack.c.b16 %v763, %v759
    %v1232 = vpack.c.b16 %v768, %v764
    %v1233 = vpack.c.b16 %v769, %v765
    %v1234 = vpack.c.b16 %v770, %v766
    %v1235 = vpack.c.b16 %v771, %v767
    %v1236 = vpack.c.b16 %v776, %v772
    %v1237 = vpack.c.b16 %v777, %v773
    %v1238 = vpack.c.b16 %v778, %v774
    %v1239 = vpack.c.b16 %v779, %v775
    %v1240 = vpack.c.b16 %v784, %v780
    %v1241 = vpack.c.b16 %v785, %v781
    %v1242 = vpack.c.b16 %v786, %v782
    %v1243 = vpack.c.b16 %v787, %v783
    %v1244 = vpack.c.b16 %v792, %v788
    %v1245 = vpack.c.b16 %v793, %v789
    %v1246 = vpack.c.b16 %v794, %v790
    %v1247 = vpack.c.b16 %v795, %v791
    %v1248 = vpack.c.b16 %v800, %v796
    %v1249 = vpack.c.b16 %v801, %v797
    %v1250 = vpack.c.b16 %v802, %v798
    %v1251 = vpack.c.b16 %v803, %v799
    %v1252 = vpack.c.b16 %v808, %v804
    %v1253 = vpack.c.b16 %v809, %v805
    %v1254 = vpack.c.b16 %v810, %v806
    %v1255 = vpack.c.b16 %v811, %v807
    %v1256 = vpack.c.b16 %v816, %v812
    %v1257 = vpack.c.b16 %v817, %v813
    %v1258 = vpack.c.b16 %v818, %v814
    %v1259 = vpack.c.b16 %v819, %v815
    %v1260 = vpack.c.b16 %v824, %v820
    %v1261 = vpack.c.b16 %v825, %v821
    %v1262 = vpack.c.b16 %v826, %v822
    %v1263 = vpack.c.b16 %v827, %v823
    %v1264 = vpack.c.b16 %v832, %v828
    %v1265 = vpack.c.b16 %v833, %v829
    %v1266 = vpack.c.b16 %v834, %v830
    %v1267 = vpack.c.b16 %v835, %v831
    %v1268 = vpack.c.b16 %v840, %v836
    %v1269 = vpack.c.b16 %v841, %v837
    %v1270 = vpack.c.b16 %v842, %v838
    %v1271 = vpack.c.b16 %v843, %v839
    %v1272 = vpack.c.b16 %v848, %v844
    %v1273 = vpack.c.b16 %v849, %v845
    %v1274 = vpack.c.b16 %v850, %v846
    %v1275 = vpack.c.b16 %v851, %v847
    %v1276 = vpack.c.b16 %v856, %v852
    %v1277 = vpack.c.b16 %v857, %v853
    %v1278 = vpack.c.b16 %v858, %v854
    %v1279 = vpack.c.b16 %v859, %v855
    %v1280 = vpack.c.b16 %v864, %v860
    %v1281 = vpack.c.b16 %v865, %v861
    %v1282 = vpack.c.b16 %v866, %v862
    %v1283 = vpack.c.b16 %v867, %v863
    %v1284 = vpack.c.b16 %v872, %v868
    %v1285 = vpack.c.b16 %v873, %v869
    %v1286 = vpack.c.b16 %v874, %v870
    %v1287 = vpack.c.b16 %v875, %v871
    %v1288 = vpack.c.b16 %v880, %v876
    %v1289 = vpack.c.b16 %v881, %v877
    %v1290 = vpack.c.b16 %v882, %v878
    %v1291 = vpack.c.b16 %v883, %v879
    %v1292 = vpack.c.b16 %v888, %v884
    %v1293 = vpack.c.b16 %v889, %v885
    %v1294 = vpack.c.b16 %v890, %v886
    %v1295 = vpack.c.b16 %v891, %v887
    %v1296 = vpack.c.b16 %v896, %v892
    %v1297 = vpack.c.b16 %v897, %v893
    %v1298 = vpack.c.b16 %v898, %v894
    %v1299 = vpack.c.b16 %v899, %v895
    %v1300 = vpack.c.b16 %v904, %v900
    %v1301 = vpack.c.b16 %v905, %v901
    %v1302 = vpack.c.b16 %v906, %v902
    %v1303 = vpack.c.b16 %v907, %v903
    %v1304 = vpack.c.b16 %v912, %v908
    %v1305 = vpack.c.b16 %v913, %v909
    %v1306 = vpack.c.b16 %v914, %v910
    %v1307 = vpack.c.b16 %v915, %v911
    %v1308 = vpack.c.b16 %v920, %v916
    %v1309 = vpack.c.b16 %v921, %v917
    %v1310 = vpack.c.b16 %v922, %v918
    %v1311 = vpack.c.b16 %v923, %v919
    %v1312 = vpack.c.b16 %v928, %v924
    %v1313 = vpack.c.b16 %v929, %v925
    %v1314 = vpack.c.b16 %v930, %v926
    %v1315 = vpack.c.b16 %v931, %v927
    %v1316 = vpack.c.b16 %v936, %v932
    %v1317 = vpack.c.b16 %v937, %v933
    %v1318 = vpack.c.b16 %v938, %v934
    %v1319 = vpack.c.b16 %v939, %v935
    %v1320 = vpack.c.b16 %v944, %v940
    %v1321 = vpack.c.b16 %v945, %v941
    %v1322 = vpack.c.b16 %v946, %v942
    %v1323 = vpack.c.b16 %v947, %v943
    %v1324 = vpack.c.b16 %v952, %v948
    %v1325 = vpack.c.b16 %v953, %v949
    %v1326 = vpack.c.b16 %v954, %v950
    %v1327 = vpack.c.b16 %v955, %v951
    %v1328 = vpack.c.b16 %v960, %v956
    %v1329 = vpack.c.b16 %v961, %v957
    %v1330 = vpack.c.b16 %v962, %v958
    %v1331 = vpack.c.b16 %v963, %v959
    %v1332 = vpack.c.b16 %v968, %v964
    %v1333 = vpack.c.b16 %v969, %v965
    %v1334 = vpack.c.b16 %v970, %v966
    %v1335 = vpack.c.b16 %v971, %v967
    %v1336 = vpack.c.b16 %v976, %v972
    %v1337 = vpack.c.b16 %v977, %v973
    %v1338 = vpack.c.b16 %v978, %v974
    %v1339 = vpack.c.b16 %v979, %v975
    %v1340 = vpack.c.b16 %v984, %v980
    %v1341 = vpack.c.b16 %v985, %v981
    %v1342 = vpack.c.b16 %v986, %v982
    %v1343 = vpack.c.b16 %v987, %v983
    %v1344 = vpack.c.b16 %v992, %v988
    %v1345 = vpack.c.b16 %v993, %v989
    %v1346 = vpack.c.b16 %v994, %v990
    %v1347 = vpack.c.b16 %v995, %v991
    %v1348 = vpack.c.b16 %v1000, %v996
    %v1349 = vpack.c.b16 %v1001, %v997
    %v1350 = vpack.c.b16 %v1002, %v998
    %v1351 = vpack.c.b16 %v1003, %v999
    %v1352 = vpack.c.b16 %v1008, %v1004
    %v1353 = vpack.c.b16 %v1009, %v1005
    %v1354 = vpack.c.b16 %v1010, %v1006
    %v1355 = vpack.c.b16 %v1011, %v1007
    %v1356 = vpack.c.b16 %v1016, %v1012
    %v1357 = vpack.c.b16 %v1017, %v1013
    %v1358 = vpack.c.b16 %v1018, %v1014
    %v1359 = vpack.c.b16 %v1019, %v1015
    %v1360 = vpack.c.b16 %v1024, %v1020
    %v1361 = vpack.c.b16 %v1025, %v1021
    %v1362 = vpack.c.b16 %v1026, %v1022
    %v1363 = vpack.c.b16 %v1027, %v1023
    %v1364 = vpack.c.b16 %v1032, %v1028
    %v1365 = vpack.c.b16 %v1033, %v1029
    %v1366 = vpack.c.b16 %v1034, %v1030
    %v1367 = vpack.c.b16 %v1035, %v1031
    %v1368 = vpack.c.b16 %v1040, %v1036
    %v1369 = vpack.c.b16 %v1041, %v1037
    %v1370 = vpack.c.b16 %v1042, %v1038
    %v1371 = vpack.c.b16 %v1043, %v1039
    %v1372 = vpack.c.b16 %v1048, %v1044
    %v1373 = vpack.c.b16 %v1049, %v1045
    %v1374 = vpack.c.b16 %v1050, %v1046
    %v1375 = vpack.c.b16 %v1051, %v1047
    %v1376 = vpack.c.b16 %v1056, %v1052
    %v1377 = vpack.c.b16 %v1057, %v1053
    %v1378 = vpack.c.b16 %v1058, %v1054
    %v1379 = vpack.c.b16 %v1059, %v1055
    %v1380 = vpack.c.b16 %v1064, %v1060
    %v1381 = vpack.c.b16 %v1065, %v1061
    %v1382 = vpack.c.b16 %v1066, %v1062
    %v1383 = vpack.c.b16 %v1067, %v1063
    %v1384 = vpack.c.b16 %v1072, %v1068
    %v1385 = vpack.c.b16 %v1073, %v1069
    %v1386 = vpack.c.b16 %v1074, %v1070
    %v1387 = vpack.c.b16 %v1075, %v1071
    %v1388 = vpack.c.b16 %v1080, %v1076
    %v1389 = vpack.c.b16 %v1081, %v1077
    %v1390 = vpack.c.b16 %v1082, %v1078
    %v1391 = vpack.c.b16 %v1083, %v1079
    %v1392 = vpack.c.b16 %v1088, %v1084
    %v1393 = vpack.c.b16 %v1089, %v1085
    %v1394 = vpack.c.b16 %v1090, %v1086
    %v1395 = vpack.c.b16 %v1091, %v1087
    %v1396 = vpack.c.b16 %v1096, %v1092
    %v1397 = vpack.c.b16 %v1097, %v1093
    %v1398 = vpack.c.b16 %v1098, %v1094
    %v1399 = vpack.c.b16 %v1099, %v1095
    %v1400 = vpack.c.b16 %v1104, %v1100
    %v1401 = vpack.c.b16 %v1105, %v1101
    %v1402 = vpack.c.b16 %v1106, %v1102
    %v1403 = vpack.c.b16 %v1107, %v1103
    %v1404 = vpack.c.b16 %v1112, %v1108
    %v1405 = vpack.c.b16 %v1113, %v1109
    %v1406 = vpack.c.b16 %v1114, %v1110
    %v1407 = vpack.c.b16 %v1115, %v1111
    %v1408 = vpack.c.b16 %v1120, %v1116
    %v1409 = vpack.c.b16 %v1121, %v1117
    %v1410 = vpack.c.b16 %v1122, %v1118
    %v1411 = vpack.c.b16 %v1123, %v1119
    %v1412 = vpack.c.b16 %v1128, %v1124
    %v1413 = vpack.c.b16 %v1129, %v1125
    %v1414 = vpack.c.b16 %v1130, %v1126
    %v1415 = vpack.c.b16 %v1131, %v1127
    %v1416 = vpack.c.b16 %v1136, %v1132
    %v1417 = vpack.c.b16 %v1137, %v1133
    %v1418 = vpack.c.b16 %v1138, %v1134
    %v1419 = vpack.c.b16 %v1139, %v1135
    %v1420 = vpack.c.b16 %v1144, %v1140
    %v1421 = vpack.c.b16 %v1145, %v1141
    %v1422 = vpack.c.b16 %v1146, %v1142
    %v1423 = vpack.c.b16 %v1147, %v1143
    %v1424 = vpack.c.b16 %v1152, %v1148
    %v1425 = vpack.c.b16 %v1153, %v1149
    %v1426 = vpack.c.b16 %v1154, %v1150
    %v1427 = vpack.c.b16 %v1155, %v1151
    %v1428 = vpack.c.b16 %v1160, %v1156
    %v1429 = vpack.c.b16 %v1161, %v1157
    %v1430 = vpack.c.b16 %v1162, %v1158
    %v1431 = vpack.c.b16 %v1163, %v1159
    %v1432 = vpack.c.b16 %v1168, %v1164
    %v1433 = vpack.c.b16 %v1169, %v1165
    %v1434 = vpack.c.b16 %v1170, %v1166
    %v1435 = vpack.c.b16 %v1171, %v1167
    %v1436 = vpack.c.b16 %v1176, %v1172
    %v1437 = vpack.c.b16 %v1177, %v1173
    %v1438 = vpack.c.b16 %v1178, %v1174
    %v1439 = vpack.c.b16 %v1179, %v1175
    %v1440 = vpack.c.b16 %v1184, %v1180
    %v1441 = vpack.c.b16 %v1185, %v1181
    %v1442 = vpack.c.b16 %v1186, %v1182
    %v1443 = vpack.c.b16 %v1187, %v1183
    %1700 = vmatpush.bf16.msra.mxu0 %v1216
    %1701 = vmatpush.bf16.msra.mxu0 %v1212
    %1702 = vmatpush.bf16.msra.mxu0 %v1208
    %1703 = vmatpush.bf16.msra.mxu0 %v1204
    %1704 = vmatpush.bf16.msra.mxu0 %v1200
    %1705 = vmatpush.bf16.msra.mxu0 %v1196
    %1706 = vmatpush.bf16.msra.mxu0 %v1192
    %1707 = vmatpush.bf16.msra.mxu0 %v1188
    %1708 = vmatmul.bf16.gmra.mxu0 %v130
    %v1709 = vpop.f32.mrf.mxu0
    %v1710 = vadd.f32 %v412, %v1709
    %v1711 = vpop.f32.mrf.mxu0
    %v1712 = vadd.f32 %v412, %v1711
    %1713 = vmatmul.bf16.gmra.mxu0 %v138
    %v1714 = vpop.f32.mrf.mxu0
    %v1715 = vadd.f32 %v412, %v1714
    %v1716 = vpop.f32.mrf.mxu0
    %v1717 = vadd.f32 %v412, %v1716
    %1718 = vmatmul.bf16.gmra.mxu0 %v146
    %v1719 = vpop.f32.mrf.mxu0
    %v1720 = vadd.f32 %v412, %v1719
    %v1721 = vpop.f32.mrf.mxu0
    %v1722 = vadd.f32 %v412, %v1721
    %1723 = vdwg.mxu0
    %1724 = vmatpush.bf16.msra.mxu0 %v1248
    %1725 = vmatpush.bf16.msra.mxu0 %v1244
    %1726 = vmatpush.bf16.msra.mxu0 %v1240
    %1727 = vmatpush.bf16.msra.mxu0 %v1236
    %1728 = vmatpush.bf16.msra.mxu0 %v1232
    %1729 = vmatpush.bf16.msra.mxu0 %v1228
    %1730 = vmatpush.bf16.msra.mxu0 %v1224
    %1731 = vmatpush.bf16.msra.mxu0 %v1220
    %1732 = vmatmul.bf16.gmra.mxu0 %v131
    %v1733 = vpop.f32.mrf.mxu0
    %v1734 = vadd.f32 %v1710, %v1733
    %v1735 = vpop.f32.mrf.mxu0
    %v1736 = vadd.f32 %v1712, %v1735
    %1737 = vmatmul.bf16.gmra.mxu0 %v139
    %v1738 = vpop.f32.mrf.mxu0
    %v1739 = vadd.f32 %v1715, %v1738
    %v1740 = vpop.f32.mrf.mxu0
    %v1741 = vadd.f32 %v1717, %v1740
    %1742 = vmatmul.bf16.gmra.mxu0 %v147
    %v1743 = vpop.f32.mrf.mxu0
    %v1744 = vadd.f32 %v1720, %v1743
    %v1745 = vpop.f32.mrf.mxu0
    %v1746 = vadd.f32 %v1722, %v1745
    %1747 = vdwg.mxu0
    %1748 = vmatpush.bf16.msra.mxu0 %v1280
    %1749 = vmatpush.bf16.msra.mxu0 %v1276
    %1750 = vmatpush.bf16.msra.mxu0 %v1272
    %1751 = vmatpush.bf16.msra.mxu0 %v1268
    %1752 = vmatpush.bf16.msra.mxu0 %v1264
    %1753 = vmatpush.bf16.msra.mxu0 %v1260
    %1754 = vmatpush.bf16.msra.mxu0 %v1256
    %1755 = vmatpush.bf16.msra.mxu0 %v1252
    %1756 = vmatmul.bf16.gmra.mxu0 %v132
    %v1757 = vpop.f32.mrf.mxu0
    %v1758 = vadd.f32 %v1734, %v1757
    %v1759 = vpop.f32.mrf.mxu0
    %v1760 = vadd.f32 %v1736, %v1759
    %1761 = vmatmul.bf16.gmra.mxu0 %v140
    %v1762 = vpop.f32.mrf.mxu0
    %v1763 = vadd.f32 %v1739, %v1762
    %v1764 = vpop.f32.mrf.mxu0
    %v1765 = vadd.f32 %v1741, %v1764
    %1766 = vmatmul.bf16.gmra.mxu0 %v148
    %v1767 = vpop.f32.mrf.mxu0
    %v1768 = vadd.f32 %v1744, %v1767
    %v1769 = vpop.f32.mrf.mxu0
    %v1770 = vadd.f32 %v1746, %v1769
    %1771 = vdwg.mxu0
    %1772 = vmatpush.bf16.msra.mxu0 %v1312
    %1773 = vmatpush.bf16.msra.mxu0 %v1308
    %1774 = vmatpush.bf16.msra.mxu0 %v1304
    %1775 = vmatpush.bf16.msra.mxu0 %v1300
    %1776 = vmatpush.bf16.msra.mxu0 %v1296
    %1777 = vmatpush.bf16.msra.mxu0 %v1292
    %1778 = vmatpush.bf16.msra.mxu0 %v1288
    %1779 = vmatpush.bf16.msra.mxu0 %v1284
    %1780 = vmatmul.bf16.gmra.mxu0 %v133
    %v1781 = vpop.f32.mrf.mxu0
    %v1782 = vadd.f32 %v1758, %v1781
    %v1783 = vpop.f32.mrf.mxu0
    %v1784 = vadd.f32 %v1760, %v1783
    %1785 = vmatmul.bf16.gmra.mxu0 %v141
    %v1786 = vpop.f32.mrf.mxu0
    %v1787 = vadd.f32 %v1763, %v1786
    %v1788 = vpop.f32.mrf.mxu0
    %v1789 = vadd.f32 %v1765, %v1788
    %1790 = vmatmul.bf16.gmra.mxu0 %v149
    %v1791 = vpop.f32.mrf.mxu0
    %v1792 = vadd.f32 %v1768, %v1791
    %v1793 = vpop.f32.mrf.mxu0
    %v1794 = vadd.f32 %v1770, %v1793
    %1795 = vdwg.mxu0
    %1796 = vmatpush.bf16.msra.mxu0 %v1344
    %1797 = vmatpush.bf16.msra.mxu0 %v1340
    %1798 = vmatpush.bf16.msra.mxu0 %v1336
    %1799 = vmatpush.bf16.msra.mxu0 %v1332
    %1800 = vmatpush.bf16.msra.mxu0 %v1328
    %1801 = vmatpush.bf16.msra.mxu0 %v1324
    %1802 = vmatpush.bf16.msra.mxu0 %v1320
    %1803 = vmatpush.bf16.msra.mxu0 %v1316
    %1804 = vmatmul.bf16.gmra.mxu0 %v134
    %v1805 = vpop.f32.mrf.mxu0
    %v1806 = vadd.f32 %v1782, %v1805
    %v1807 = vpop.f32.mrf.mxu0
    %v1808 = vadd.f32 %v1784, %v1807
    %1809 = vmatmul.bf16.gmra.mxu0 %v142
    %v1810 = vpop.f32.mrf.mxu0
    %v1811 = vadd.f32 %v1787, %v1810
    %v1812 = vpop.f32.mrf.mxu0
    %v1813 = vadd.f32 %v1789, %v1812
    %1814 = vmatmul.bf16.gmra.mxu0 %v150
    %v1815 = vpop.f32.mrf.mxu0
    %v1816 = vadd.f32 %v1792, %v1815
    %v1817 = vpop.f32.mrf.mxu0
    %v1818 = vadd.f32 %v1794, %v1817
    %1819 = vdwg.mxu0
    %1820 = vmatpush.bf16.msra.mxu0 %v1376
    %1821 = vmatpush.bf16.msra.mxu0 %v1372
    %1822 = vmatpush.bf16.msra.mxu0 %v1368
    %1823 = vmatpush.bf16.msra.mxu0 %v1364
    %1824 = vmatpush.bf16.msra.mxu0 %v1360
    %1825 = vmatpush.bf16.msra.mxu0 %v1356
    %1826 = vmatpush.bf16.msra.mxu0 %v1352
    %1827 = vmatpush.bf16.msra.mxu0 %v1348
    %1828 = vmatmul.bf16.gmra.mxu0 %v135
    %v1829 = vpop.f32.mrf.mxu0
    %v1830 = vadd.f32 %v1806, %v1829
    %v1831 = vpop.f32.mrf.mxu0
    %v1832 = vadd.f32 %v1808, %v1831
    %1833 = vmatmul.bf16.gmra.mxu0 %v143
    %v1834 = vpop.f32.mrf.mxu0
    %v1835 = vadd.f32 %v1811, %v1834
    %v1836 = vpop.f32.mrf.mxu0
    %v1837 = vadd.f32 %v1813, %v1836
    %1838 = vmatmul.bf16.gmra.mxu0 %v151
    %v1839 = vpop.f32.mrf.mxu0
    %v1840 = vadd.f32 %v1816, %v1839
    %v1841 = vpop.f32.mrf.mxu0
    %v1842 = vadd.f32 %v1818, %v1841
    %1843 = vdwg.mxu0
    %1844 = vmatpush.bf16.msra.mxu0 %v1408
    %1845 = vmatpush.bf16.msra.mxu0 %v1404
    %1846 = vmatpush.bf16.msra.mxu0 %v1400
    %1847 = vmatpush.bf16.msra.mxu0 %v1396
    %1848 = vmatpush.bf16.msra.mxu0 %v1392
    %1849 = vmatpush.bf16.msra.mxu0 %v1388
    %1850 = vmatpush.bf16.msra.mxu0 %v1384
    %1851 = vmatpush.bf16.msra.mxu0 %v1380
    %1852 = vmatmul.bf16.gmra.mxu0 %v136
    %v1853 = vpop.f32.mrf.mxu0
    %v1854 = vadd.f32 %v1830, %v1853
    %v1855 = vpop.f32.mrf.mxu0
    %v1856 = vadd.f32 %v1832, %v1855
    %1857 = vmatmul.bf16.gmra.mxu0 %v144
    %v1858 = vpop.f32.mrf.mxu0
    %v1859 = vadd.f32 %v1835, %v1858
    %v1860 = vpop.f32.mrf.mxu0
    %v1861 = vadd.f32 %v1837, %v1860
    %1862 = vmatmul.bf16.gmra.mxu0 %v152
    %v1863 = vpop.f32.mrf.mxu0
    %v1864 = vadd.f32 %v1840, %v1863
    %v1865 = vpop.f32.mrf.mxu0
    %v1866 = vadd.f32 %v1842, %v1865
    %1867 = vdwg.mxu0
    %1868 = vmatpush.bf16.msra.mxu0 %v1440
    %1869 = vmatpush.bf16.msra.mxu0 %v1436
    %1870 = vmatpush.bf16.msra.mxu0 %v1432
    %1871 = vmatpush.bf16.msra.mxu0 %v1428
    %1872 = vmatpush.bf16.msra.mxu0 %v1424
    %1873 = vmatpush.bf16.msra.mxu0 %v1420
    %1874 = vmatpush.bf16.msra.mxu0 %v1416
    %1875 = vmatpush.bf16.msra.mxu0 %v1412
    %1876 = vmatmul.bf16.gmra.mxu0 %v137
    %v1877 = vpop.f32.mrf.mxu0
    %v1878 = vadd.f32 %v1854, %v1877
    %v1879 = vpop.f32.mrf.mxu0
    %v1880 = vadd.f32 %v1856, %v1879
    %1881 = vmatmul.bf16.gmra.mxu0 %v145
    %v1882 = vpop.f32.mrf.mxu0
    %v1883 = vadd.f32 %v1859, %v1882
    %v1884 = vpop.f32.mrf.mxu0
    %v1885 = vadd.f32 %v1861, %v1884
    %1886 = vmatmul.bf16.gmra.mxu0 %v153
    %v1887 = vpop.f32.mrf.mxu0
    %v1888 = vadd.f32 %v1864, %v1887
    %v1889 = vpop.f32.mrf.mxu0
    %v1890 = vadd.f32 %v1866, %v1889
    %1891 = vdwg.mxu0
    %1892 = vmatpush.bf16.msra.mxu0 %v1217
    %1893 = vmatpush.bf16.msra.mxu0 %v1213
    %1894 = vmatpush.bf16.msra.mxu0 %v1209
    %1895 = vmatpush.bf16.msra.mxu0 %v1205
    %1896 = vmatpush.bf16.msra.mxu0 %v1201
    %1897 = vmatpush.bf16.msra.mxu0 %v1197
    %1898 = vmatpush.bf16.msra.mxu0 %v1193
    %1899 = vmatpush.bf16.msra.mxu0 %v1189
    %1900 = vmatmul.bf16.gmra.mxu0 %v130
    %v1901 = vpop.f32.mrf.mxu0
    %v1902 = vadd.f32 %v413, %v1901
    %v1903 = vpop.f32.mrf.mxu0
    %v1904 = vadd.f32 %v413, %v1903
    %1905 = vmatmul.bf16.gmra.mxu0 %v138
    %v1906 = vpop.f32.mrf.mxu0
    %v1907 = vadd.f32 %v413, %v1906
    %v1908 = vpop.f32.mrf.mxu0
    %v1909 = vadd.f32 %v413, %v1908
    %1910 = vmatmul.bf16.gmra.mxu0 %v146
    %v1911 = vpop.f32.mrf.mxu0
    %v1912 = vadd.f32 %v413, %v1911
    %v1913 = vpop.f32.mrf.mxu0
    %v1914 = vadd.f32 %v413, %v1913
    %1915 = vdwg.mxu0
    %1916 = vmatpush.bf16.msra.mxu0 %v1249
    %1917 = vmatpush.bf16.msra.mxu0 %v1245
    %1918 = vmatpush.bf16.msra.mxu0 %v1241
    %1919 = vmatpush.bf16.msra.mxu0 %v1237
    %1920 = vmatpush.bf16.msra.mxu0 %v1233
    %1921 = vmatpush.bf16.msra.mxu0 %v1229
    %1922 = vmatpush.bf16.msra.mxu0 %v1225
    %1923 = vmatpush.bf16.msra.mxu0 %v1221
    %1924 = vmatmul.bf16.gmra.mxu0 %v131
    %v1925 = vpop.f32.mrf.mxu0
    %v1926 = vadd.f32 %v1902, %v1925
    %v1927 = vpop.f32.mrf.mxu0
    %v1928 = vadd.f32 %v1904, %v1927
    %1929 = vmatmul.bf16.gmra.mxu0 %v139
    %v1930 = vpop.f32.mrf.mxu0
    %v1931 = vadd.f32 %v1907, %v1930
    %v1932 = vpop.f32.mrf.mxu0
    %v1933 = vadd.f32 %v1909, %v1932
    %1934 = vmatmul.bf16.gmra.mxu0 %v147
    %v1935 = vpop.f32.mrf.mxu0
    %v1936 = vadd.f32 %v1912, %v1935
    %v1937 = vpop.f32.mrf.mxu0
    %v1938 = vadd.f32 %v1914, %v1937
    %1939 = vdwg.mxu0
    %1940 = vmatpush.bf16.msra.mxu0 %v1281
    %1941 = vmatpush.bf16.msra.mxu0 %v1277
    %1942 = vmatpush.bf16.msra.mxu0 %v1273
    %1943 = vmatpush.bf16.msra.mxu0 %v1269
    %1944 = vmatpush.bf16.msra.mxu0 %v1265
    %1945 = vmatpush.bf16.msra.mxu0 %v1261
    %1946 = vmatpush.bf16.msra.mxu0 %v1257
    %1947 = vmatpush.bf16.msra.mxu0 %v1253
    %1948 = vmatmul.bf16.gmra.mxu0 %v132
    %v1949 = vpop.f32.mrf.mxu0
    %v1950 = vadd.f32 %v1926, %v1949
    %v1951 = vpop.f32.mrf.mxu0
    %v1952 = vadd.f32 %v1928, %v1951
    %1953 = vmatmul.bf16.gmra.mxu0 %v140
    %v1954 = vpop.f32.mrf.mxu0
    %v1955 = vadd.f32 %v1931, %v1954
    %v1956 = vpop.f32.mrf.mxu0
    %v1957 = vadd.f32 %v1933, %v1956
    %1958 = vmatmul.bf16.gmra.mxu0 %v148
    %v1959 = vpop.f32.mrf.mxu0
    %v1960 = vadd.f32 %v1936, %v1959
    %v1961 = vpop.f32.mrf.mxu0
    %v1962 = vadd.f32 %v1938, %v1961
    %1963 = vdwg.mxu0
    %1964 = vmatpush.bf16.msra.mxu0 %v1313
    %1965 = vmatpush.bf16.msra.mxu0 %v1309
    %1966 = vmatpush.bf16.msra.mxu0 %v1305
    %1967 = vmatpush.bf16.msra.mxu0 %v1301
    %1968 = vmatpush.bf16.msra.mxu0 %v1297
    %1969 = vmatpush.bf16.msra.mxu0 %v1293
    %1970 = vmatpush.bf16.msra.mxu0 %v1289
    %1971 = vmatpush.bf16.msra.mxu0 %v1285
    %1972 = vmatmul.bf16.gmra.mxu0 %v133
    %v1973 = vpop.f32.mrf.mxu0
    %v1974 = vadd.f32 %v1950, %v1973
    %v1975 = vpop.f32.mrf.mxu0
    %v1976 = vadd.f32 %v1952, %v1975
    %1977 = vmatmul.bf16.gmra.mxu0 %v141
    %v1978 = vpop.f32.mrf.mxu0
    %v1979 = vadd.f32 %v1955, %v1978
    %v1980 = vpop.f32.mrf.mxu0
    %v1981 = vadd.f32 %v1957, %v1980
    %1982 = vmatmul.bf16.gmra.mxu0 %v149
    %v1983 = vpop.f32.mrf.mxu0
    %v1984 = vadd.f32 %v1960, %v1983
    %v1985 = vpop.f32.mrf.mxu0
    %v1986 = vadd.f32 %v1962, %v1985
    %1987 = vdwg.mxu0
    %1988 = vmatpush.bf16.msra.mxu0 %v1345
    %1989 = vmatpush.bf16.msra.mxu0 %v1341
    %1990 = vmatpush.bf16.msra.mxu0 %v1337
    %1991 = vmatpush.bf16.msra.mxu0 %v1333
    %1992 = vmatpush.bf16.msra.mxu0 %v1329
    %1993 = vmatpush.bf16.msra.mxu0 %v1325
    %1994 = vmatpush.bf16.msra.mxu0 %v1321
    %1995 = vmatpush.bf16.msra.mxu0 %v1317
    %1996 = vmatmul.bf16.gmra.mxu0 %v134
    %v1997 = vpop.f32.mrf.mxu0
    %v1998 = vadd.f32 %v1974, %v1997
    %v1999 = vpop.f32.mrf.mxu0
    %v2000 = vadd.f32 %v1976, %v1999
    %2001 = vmatmul.bf16.gmra.mxu0 %v142
    %v2002 = vpop.f32.mrf.mxu0
    %v2003 = vadd.f32 %v1979, %v2002
    %v2004 = vpop.f32.mrf.mxu0
    %v2005 = vadd.f32 %v1981, %v2004
    %2006 = vmatmul.bf16.gmra.mxu0 %v150
    %v2007 = vpop.f32.mrf.mxu0
    %v2008 = vadd.f32 %v1984, %v2007
    %v2009 = vpop.f32.mrf.mxu0
    %v2010 = vadd.f32 %v1986, %v2009
    %2011 = vdwg.mxu0
    %2012 = vmatpush.bf16.msra.mxu0 %v1377
    %2013 = vmatpush.bf16.msra.mxu0 %v1373
    %2014 = vmatpush.bf16.msra.mxu0 %v1369
    %2015 = vmatpush.bf16.msra.mxu0 %v1365
    %2016 = vmatpush.bf16.msra.mxu0 %v1361
    %2017 = vmatpush.bf16.msra.mxu0 %v1357
    %2018 = vmatpush.bf16.msra.mxu0 %v1353
    %2019 = vmatpush.bf16.msra.mxu0 %v1349
    %2020 = vmatmul.bf16.gmra.mxu0 %v135
    %v2021 = vpop.f32.mrf.mxu0
    %v2022 = vadd.f32 %v1998, %v2021
    %v2023 = vpop.f32.mrf.mxu0
    %v2024 = vadd.f32 %v2000, %v2023
    %2025 = vmatmul.bf16.gmra.mxu0 %v143
    %v2026 = vpop.f32.mrf.mxu0
    %v2027 = vadd.f32 %v2003, %v2026
    %v2028 = vpop.f32.mrf.mxu0
    %v2029 = vadd.f32 %v2005, %v2028
    %2030 = vmatmul.bf16.gmra.mxu0 %v151
    %v2031 = vpop.f32.mrf.mxu0
    %v2032 = vadd.f32 %v2008, %v2031
    %v2033 = vpop.f32.mrf.mxu0
    %v2034 = vadd.f32 %v2010, %v2033
    %2035 = vdwg.mxu0
    %2036 = vmatpush.bf16.msra.mxu0 %v1409
    %2037 = vmatpush.bf16.msra.mxu0 %v1405
    %2038 = vmatpush.bf16.msra.mxu0 %v1401
    %2039 = vmatpush.bf16.msra.mxu0 %v1397
    %2040 = vmatpush.bf16.msra.mxu0 %v1393
    %2041 = vmatpush.bf16.msra.mxu0 %v1389
    %2042 = vmatpush.bf16.msra.mxu0 %v1385
    %2043 = vmatpush.bf16.msra.mxu0 %v1381
    %2044 = vmatmul.bf16.gmra.mxu0 %v136
    %v2045 = vpop.f32.mrf.mxu0
    %v2046 = vadd.f32 %v2022, %v2045
    %v2047 = vpop.f32.mrf.mxu0
    %v2048 = vadd.f32 %v2024, %v2047
    %2049 = vmatmul.bf16.gmra.mxu0 %v144
    %v2050 = vpop.f32.mrf.mxu0
    %v2051 = vadd.f32 %v2027, %v2050
    %v2052 = vpop.f32.mrf.mxu0
    %v2053 = vadd.f32 %v2029, %v2052
    %2054 = vmatmul.bf16.gmra.mxu0 %v152
    %v2055 = vpop.f32.mrf.mxu0
    %v2056 = vadd.f32 %v2032, %v2055
    %v2057 = vpop.f32.mrf.mxu0
    %v2058 = vadd.f32 %v2034, %v2057
    %2059 = vdwg.mxu0
    %2060 = vmatpush.bf16.msra.mxu0 %v1441
    %2061 = vmatpush.bf16.msra.mxu0 %v1437
    %2062 = vmatpush.bf16.msra.mxu0 %v1433
    %2063 = vmatpush.bf16.msra.mxu0 %v1429
    %2064 = vmatpush.bf16.msra.mxu0 %v1425
    %2065 = vmatpush.bf16.msra.mxu0 %v1421
    %2066 = vmatpush.bf16.msra.mxu0 %v1417
    %2067 = vmatpush.bf16.msra.mxu0 %v1413
    %2068 = vmatmul.bf16.gmra.mxu0 %v137
    %v2069 = vpop.f32.mrf.mxu0
    %v2070 = vadd.f32 %v2046, %v2069
    %v2071 = vpop.f32.mrf.mxu0
    %v2072 = vadd.f32 %v2048, %v2071
    %2073 = vmatmul.bf16.gmra.mxu0 %v145
    %v2074 = vpop.f32.mrf.mxu0
    %v2075 = vadd.f32 %v2051, %v2074
    %v2076 = vpop.f32.mrf.mxu0
    %v2077 = vadd.f32 %v2053, %v2076
    %2078 = vmatmul.bf16.gmra.mxu0 %v153
    %v2079 = vpop.f32.mrf.mxu0
    %v2080 = vadd.f32 %v2056, %v2079
    %v2081 = vpop.f32.mrf.mxu0
    %v2082 = vadd.f32 %v2058, %v2081
    %2083 = vdwg.mxu0
    %2084 = vmatpush.bf16.msra.mxu0 %v1218
    %2085 = vmatpush.bf16.msra.mxu0 %v1214
    %2086 = vmatpush.bf16.msra.mxu0 %v1210
    %2087 = vmatpush.bf16.msra.mxu0 %v1206
    %2088 = vmatpush.bf16.msra.mxu0 %v1202
    %2089 = vmatpush.bf16.msra.mxu0 %v1198
    %2090 = vmatpush.bf16.msra.mxu0 %v1194
    %2091 = vmatpush.bf16.msra.mxu0 %v1190
    %2092 = vmatmul.bf16.gmra.mxu0 %v130
    %v2093 = vpop.f32.mrf.mxu0
    %v2094 = vadd.f32 %v414, %v2093
    %v2095 = vpop.f32.mrf.mxu0
    %v2096 = vadd.f32 %v414, %v2095
    %2097 = vmatmul.bf16.gmra.mxu0 %v138
    %v2098 = vpop.f32.mrf.mxu0
    %v2099 = vadd.f32 %v414, %v2098
    %v2100 = vpop.f32.mrf.mxu0
    %v2101 = vadd.f32 %v414, %v2100
    %2102 = vmatmul.bf16.gmra.mxu0 %v146
    %v2103 = vpop.f32.mrf.mxu0
    %v2104 = vadd.f32 %v414, %v2103
    %v2105 = vpop.f32.mrf.mxu0
    %v2106 = vadd.f32 %v414, %v2105
    %2107 = vdwg.mxu0
    %2108 = vmatpush.bf16.msra.mxu0 %v1250
    %2109 = vmatpush.bf16.msra.mxu0 %v1246
    %2110 = vmatpush.bf16.msra.mxu0 %v1242
    %2111 = vmatpush.bf16.msra.mxu0 %v1238
    %2112 = vmatpush.bf16.msra.mxu0 %v1234
    %2113 = vmatpush.bf16.msra.mxu0 %v1230
    %2114 = vmatpush.bf16.msra.mxu0 %v1226
    %2115 = vmatpush.bf16.msra.mxu0 %v1222
    %2116 = vmatmul.bf16.gmra.mxu0 %v131
    %v2117 = vpop.f32.mrf.mxu0
    %v2118 = vadd.f32 %v2094, %v2117
    %v2119 = vpop.f32.mrf.mxu0
    %v2120 = vadd.f32 %v2096, %v2119
    %2121 = vmatmul.bf16.gmra.mxu0 %v139
    %v2122 = vpop.f32.mrf.mxu0
    %v2123 = vadd.f32 %v2099, %v2122
    %v2124 = vpop.f32.mrf.mxu0
    %v2125 = vadd.f32 %v2101, %v2124
    %2126 = vmatmul.bf16.gmra.mxu0 %v147
    %v2127 = vpop.f32.mrf.mxu0
    %v2128 = vadd.f32 %v2104, %v2127
    %v2129 = vpop.f32.mrf.mxu0
    %v2130 = vadd.f32 %v2106, %v2129
    %2131 = vdwg.mxu0
    %2132 = vmatpush.bf16.msra.mxu0 %v1282
    %2133 = vmatpush.bf16.msra.mxu0 %v1278
    %2134 = vmatpush.bf16.msra.mxu0 %v1274
    %2135 = vmatpush.bf16.msra.mxu0 %v1270
    %2136 = vmatpush.bf16.msra.mxu0 %v1266
    %2137 = vmatpush.bf16.msra.mxu0 %v1262
    %2138 = vmatpush.bf16.msra.mxu0 %v1258
    %2139 = vmatpush.bf16.msra.mxu0 %v1254
    %2140 = vmatmul.bf16.gmra.mxu0 %v132
    %v2141 = vpop.f32.mrf.mxu0
    %v2142 = vadd.f32 %v2118, %v2141
    %v2143 = vpop.f32.mrf.mxu0
    %v2144 = vadd.f32 %v2120, %v2143
    %2145 = vmatmul.bf16.gmra.mxu0 %v140
    %v2146 = vpop.f32.mrf.mxu0
    %v2147 = vadd.f32 %v2123, %v2146
    %v2148 = vpop.f32.mrf.mxu0
    %v2149 = vadd.f32 %v2125, %v2148
    %2150 = vmatmul.bf16.gmra.mxu0 %v148
    %v2151 = vpop.f32.mrf.mxu0
    %v2152 = vadd.f32 %v2128, %v2151
    %v2153 = vpop.f32.mrf.mxu0
    %v2154 = vadd.f32 %v2130, %v2153
    %2155 = vdwg.mxu0
    %2156 = vmatpush.bf16.msra.mxu0 %v1314
    %2157 = vmatpush.bf16.msra.mxu0 %v1310
    %2158 = vmatpush.bf16.msra.mxu0 %v1306
    %2159 = vmatpush.bf16.msra.mxu0 %v1302
    %2160 = vmatpush.bf16.msra.mxu0 %v1298
    %2161 = vmatpush.bf16.msra.mxu0 %v1294
    %2162 = vmatpush.bf16.msra.mxu0 %v1290
    %2163 = vmatpush.bf16.msra.mxu0 %v1286
    %2164 = vmatmul.bf16.gmra.mxu0 %v133
    %v2165 = vpop.f32.mrf.mxu0
    %v2166 = vadd.f32 %v2142, %v2165
    %v2167 = vpop.f32.mrf.mxu0
    %v2168 = vadd.f32 %v2144, %v2167
    %2169 = vmatmul.bf16.gmra.mxu0 %v141
    %v2170 = vpop.f32.mrf.mxu0
    %v2171 = vadd.f32 %v2147, %v2170
    %v2172 = vpop.f32.mrf.mxu0
    %v2173 = vadd.f32 %v2149, %v2172
    %2174 = vmatmul.bf16.gmra.mxu0 %v149
    %v2175 = vpop.f32.mrf.mxu0
    %v2176 = vadd.f32 %v2152, %v2175
    %v2177 = vpop.f32.mrf.mxu0
    %v2178 = vadd.f32 %v2154, %v2177
    %2179 = vdwg.mxu0
    %2180 = vmatpush.bf16.msra.mxu0 %v1346
    %2181 = vmatpush.bf16.msra.mxu0 %v1342
    %2182 = vmatpush.bf16.msra.mxu0 %v1338
    %2183 = vmatpush.bf16.msra.mxu0 %v1334
    %2184 = vmatpush.bf16.msra.mxu0 %v1330
    %2185 = vmatpush.bf16.msra.mxu0 %v1326
    %2186 = vmatpush.bf16.msra.mxu0 %v1322
    %2187 = vmatpush.bf16.msra.mxu0 %v1318
    %2188 = vmatmul.bf16.gmra.mxu0 %v134
    %v2189 = vpop.f32.mrf.mxu0
    %v2190 = vadd.f32 %v2166, %v2189
    %v2191 = vpop.f32.mrf.mxu0
    %v2192 = vadd.f32 %v2168, %v2191
    %2193 = vmatmul.bf16.gmra.mxu0 %v142
    %v2194 = vpop.f32.mrf.mxu0
    %v2195 = vadd.f32 %v2171, %v2194
    %v2196 = vpop.f32.mrf.mxu0
    %v2197 = vadd.f32 %v2173, %v2196
    %2198 = vmatmul.bf16.gmra.mxu0 %v150
    %v2199 = vpop.f32.mrf.mxu0
    %v2200 = vadd.f32 %v2176, %v2199
    %v2201 = vpop.f32.mrf.mxu0
    %v2202 = vadd.f32 %v2178, %v2201
    %2203 = vdwg.mxu0
    %2204 = vmatpush.bf16.msra.mxu0 %v1378
    %2205 = vmatpush.bf16.msra.mxu0 %v1374
    %2206 = vmatpush.bf16.msra.mxu0 %v1370
    %2207 = vmatpush.bf16.msra.mxu0 %v1366
    %2208 = vmatpush.bf16.msra.mxu0 %v1362
    %2209 = vmatpush.bf16.msra.mxu0 %v1358
    %2210 = vmatpush.bf16.msra.mxu0 %v1354
    %2211 = vmatpush.bf16.msra.mxu0 %v1350
    %2212 = vmatmul.bf16.gmra.mxu0 %v135
    %v2213 = vpop.f32.mrf.mxu0
    %v2214 = vadd.f32 %v2190, %v2213
    %v2215 = vpop.f32.mrf.mxu0
    %v2216 = vadd.f32 %v2192, %v2215
    %2217 = vmatmul.bf16.gmra.mxu0 %v143
    %v2218 = vpop.f32.mrf.mxu0
    %v2219 = vadd.f32 %v2195, %v2218
    %v2220 = vpop.f32.mrf.mxu0
    %v2221 = vadd.f32 %v2197, %v2220
    %2222 = vmatmul.bf16.gmra.mxu0 %v151
    %v2223 = vpop.f32.mrf.mxu0
    %v2224 = vadd.f32 %v2200, %v2223
    %v2225 = vpop.f32.mrf.mxu0
    %v2226 = vadd.f32 %v2202, %v2225
    %2227 = vdwg.mxu0
    %2228 = vmatpush.bf16.msra.mxu0 %v1410
    %2229 = vmatpush.bf16.msra.mxu0 %v1406
    %2230 = vmatpush.bf16.msra.mxu0 %v1402
    %2231 = vmatpush.bf16.msra.mxu0 %v1398
    %2232 = vmatpush.bf16.msra.mxu0 %v1394
    %2233 = vmatpush.bf16.msra.mxu0 %v1390
    %2234 = vmatpush.bf16.msra.mxu0 %v1386
    %2235 = vmatpush.bf16.msra.mxu0 %v1382
    %2236 = vmatmul.bf16.gmra.mxu0 %v136
    %v2237 = vpop.f32.mrf.mxu0
    %v2238 = vadd.f32 %v2214, %v2237
    %v2239 = vpop.f32.mrf.mxu0
    %v2240 = vadd.f32 %v2216, %v2239
    %2241 = vmatmul.bf16.gmra.mxu0 %v144
    %v2242 = vpop.f32.mrf.mxu0
    %v2243 = vadd.f32 %v2219, %v2242
    %v2244 = vpop.f32.mrf.mxu0
    %v2245 = vadd.f32 %v2221, %v2244
    %2246 = vmatmul.bf16.gmra.mxu0 %v152
    %v2247 = vpop.f32.mrf.mxu0
    %v2248 = vadd.f32 %v2224, %v2247
    %v2249 = vpop.f32.mrf.mxu0
    %v2250 = vadd.f32 %v2226, %v2249
    %2251 = vdwg.mxu0
    %2252 = vmatpush.bf16.msra.mxu0 %v1442
    %2253 = vmatpush.bf16.msra.mxu0 %v1438
    %2254 = vmatpush.bf16.msra.mxu0 %v1434
    %2255 = vmatpush.bf16.msra.mxu0 %v1430
    %2256 = vmatpush.bf16.msra.mxu0 %v1426
    %2257 = vmatpush.bf16.msra.mxu0 %v1422
    %2258 = vmatpush.bf16.msra.mxu0 %v1418
    %2259 = vmatpush.bf16.msra.mxu0 %v1414
    %2260 = vmatmul.bf16.gmra.mxu0 %v137
    %v2261 = vpop.f32.mrf.mxu0
    %v2262 = vadd.f32 %v2238, %v2261
    %v2263 = vpop.f32.mrf.mxu0
    %v2264 = vadd.f32 %v2240, %v2263
    %2265 = vmatmul.bf16.gmra.mxu0 %v145
    %v2266 = vpop.f32.mrf.mxu0
    %v2267 = vadd.f32 %v2243, %v2266
    %v2268 = vpop.f32.mrf.mxu0
    %v2269 = vadd.f32 %v2245, %v2268
    %2270 = vmatmul.bf16.gmra.mxu0 %v153
    %v2271 = vpop.f32.mrf.mxu0
    %v2272 = vadd.f32 %v2248, %v2271
    %v2273 = vpop.f32.mrf.mxu0
    %v2274 = vadd.f32 %v2250, %v2273
    %2275 = vdwg.mxu0
    %2276 = vmatpush.bf16.msra.mxu0 %v1219
    %2277 = vmatpush.bf16.msra.mxu0 %v1215
    %2278 = vmatpush.bf16.msra.mxu0 %v1211
    %2279 = vmatpush.bf16.msra.mxu0 %v1207
    %2280 = vmatpush.bf16.msra.mxu0 %v1203
    %2281 = vmatpush.bf16.msra.mxu0 %v1199
    %2282 = vmatpush.bf16.msra.mxu0 %v1195
    %2283 = vmatpush.bf16.msra.mxu0 %v1191
    %2284 = vmatmul.bf16.gmra.mxu0 %v130
    %v2285 = vpop.f32.mrf.mxu0
    %v2286 = vadd.f32 %v415, %v2285
    %v2287 = vpop.f32.mrf.mxu0
    %v2288 = vadd.f32 %v415, %v2287
    %2289 = vmatmul.bf16.gmra.mxu0 %v138
    %v2290 = vpop.f32.mrf.mxu0
    %v2291 = vadd.f32 %v415, %v2290
    %v2292 = vpop.f32.mrf.mxu0
    %v2293 = vadd.f32 %v415, %v2292
    %2294 = vmatmul.bf16.gmra.mxu0 %v146
    %v2295 = vpop.f32.mrf.mxu0
    %v2296 = vadd.f32 %v415, %v2295
    %v2297 = vpop.f32.mrf.mxu0
    %v2298 = vadd.f32 %v415, %v2297
    %2299 = vdwg.mxu0
    %2300 = vmatpush.bf16.msra.mxu0 %v1251
    %2301 = vmatpush.bf16.msra.mxu0 %v1247
    %2302 = vmatpush.bf16.msra.mxu0 %v1243
    %2303 = vmatpush.bf16.msra.mxu0 %v1239
    %2304 = vmatpush.bf16.msra.mxu0 %v1235
    %2305 = vmatpush.bf16.msra.mxu0 %v1231
    %2306 = vmatpush.bf16.msra.mxu0 %v1227
    %2307 = vmatpush.bf16.msra.mxu0 %v1223
    %2308 = vmatmul.bf16.gmra.mxu0 %v131
    %v2309 = vpop.f32.mrf.mxu0
    %v2310 = vadd.f32 %v2286, %v2309
    %v2311 = vpop.f32.mrf.mxu0
    %v2312 = vadd.f32 %v2288, %v2311
    %2313 = vmatmul.bf16.gmra.mxu0 %v139
    %v2314 = vpop.f32.mrf.mxu0
    %v2315 = vadd.f32 %v2291, %v2314
    %v2316 = vpop.f32.mrf.mxu0
    %v2317 = vadd.f32 %v2293, %v2316
    %2318 = vmatmul.bf16.gmra.mxu0 %v147
    %v2319 = vpop.f32.mrf.mxu0
    %v2320 = vadd.f32 %v2296, %v2319
    %v2321 = vpop.f32.mrf.mxu0
    %v2322 = vadd.f32 %v2298, %v2321
    %2323 = vdwg.mxu0
    %2324 = vmatpush.bf16.msra.mxu0 %v1283
    %2325 = vmatpush.bf16.msra.mxu0 %v1279
    %2326 = vmatpush.bf16.msra.mxu0 %v1275
    %2327 = vmatpush.bf16.msra.mxu0 %v1271
    %2328 = vmatpush.bf16.msra.mxu0 %v1267
    %2329 = vmatpush.bf16.msra.mxu0 %v1263
    %2330 = vmatpush.bf16.msra.mxu0 %v1259
    %2331 = vmatpush.bf16.msra.mxu0 %v1255
    %2332 = vmatmul.bf16.gmra.mxu0 %v132
    %v2333 = vpop.f32.mrf.mxu0
    %v2334 = vadd.f32 %v2310, %v2333
    %v2335 = vpop.f32.mrf.mxu0
    %v2336 = vadd.f32 %v2312, %v2335
    %2337 = vmatmul.bf16.gmra.mxu0 %v140
    %v2338 = vpop.f32.mrf.mxu0
    %v2339 = vadd.f32 %v2315, %v2338
    %v2340 = vpop.f32.mrf.mxu0
    %v2341 = vadd.f32 %v2317, %v2340
    %2342 = vmatmul.bf16.gmra.mxu0 %v148
    %v2343 = vpop.f32.mrf.mxu0
    %v2344 = vadd.f32 %v2320, %v2343
    %v2345 = vpop.f32.mrf.mxu0
    %v2346 = vadd.f32 %v2322, %v2345
    %2347 = vdwg.mxu0
    %2348 = vmatpush.bf16.msra.mxu0 %v1315
    %2349 = vmatpush.bf16.msra.mxu0 %v1311
    %2350 = vmatpush.bf16.msra.mxu0 %v1307
    %2351 = vmatpush.bf16.msra.mxu0 %v1303
    %2352 = vmatpush.bf16.msra.mxu0 %v1299
    %2353 = vmatpush.bf16.msra.mxu0 %v1295
    %2354 = vmatpush.bf16.msra.mxu0 %v1291
    %2355 = vmatpush.bf16.msra.mxu0 %v1287
    %2356 = vmatmul.bf16.gmra.mxu0 %v133
    %v2357 = vpop.f32.mrf.mxu0
    %v2358 = vadd.f32 %v2334, %v2357
    %v2359 = vpop.f32.mrf.mxu0
    %v2360 = vadd.f32 %v2336, %v2359
    %2361 = vmatmul.bf16.gmra.mxu0 %v141
    %v2362 = vpop.f32.mrf.mxu0
    %v2363 = vadd.f32 %v2339, %v2362
    %v2364 = vpop.f32.mrf.mxu0
    %v2365 = vadd.f32 %v2341, %v2364
    %2366 = vmatmul.bf16.gmra.mxu0 %v149
    %v2367 = vpop.f32.mrf.mxu0
    %v2368 = vadd.f32 %v2344, %v2367
    %v2369 = vpop.f32.mrf.mxu0
    %v2370 = vadd.f32 %v2346, %v2369
    %2371 = vdwg.mxu0
    %2372 = vmatpush.bf16.msra.mxu0 %v1347
    %2373 = vmatpush.bf16.msra.mxu0 %v1343
    %2374 = vmatpush.bf16.msra.mxu0 %v1339
    %2375 = vmatpush.bf16.msra.mxu0 %v1335
    %2376 = vmatpush.bf16.msra.mxu0 %v1331
    %2377 = vmatpush.bf16.msra.mxu0 %v1327
    %2378 = vmatpush.bf16.msra.mxu0 %v1323
    %2379 = vmatpush.bf16.msra.mxu0 %v1319
    %2380 = vmatmul.bf16.gmra.mxu0 %v134
    %v2381 = vpop.f32.mrf.mxu0
    %v2382 = vadd.f32 %v2358, %v2381
    %v2383 = vpop.f32.mrf.mxu0
    %v2384 = vadd.f32 %v2360, %v2383
    %2385 = vmatmul.bf16.gmra.mxu0 %v142
    %v2386 = vpop.f32.mrf.mxu0
    %v2387 = vadd.f32 %v2363, %v2386
    %v2388 = vpop.f32.mrf.mxu0
    %v2389 = vadd.f32 %v2365, %v2388
    %2390 = vmatmul.bf16.gmra.mxu0 %v150
    %v2391 = vpop.f32.mrf.mxu0
    %v2392 = vadd.f32 %v2368, %v2391
    %v2393 = vpop.f32.mrf.mxu0
    %v2394 = vadd.f32 %v2370, %v2393
    %2395 = vdwg.mxu0
    %2396 = vmatpush.bf16.msra.mxu0 %v1379
    %2397 = vmatpush.bf16.msra.mxu0 %v1375
    %2398 = vmatpush.bf16.msra.mxu0 %v1371
    %2399 = vmatpush.bf16.msra.mxu0 %v1367
    %2400 = vmatpush.bf16.msra.mxu0 %v1363
    %2401 = vmatpush.bf16.msra.mxu0 %v1359
    %2402 = vmatpush.bf16.msra.mxu0 %v1355
    %2403 = vmatpush.bf16.msra.mxu0 %v1351
    %2404 = vmatmul.bf16.gmra.mxu0 %v135
    %v2405 = vpop.f32.mrf.mxu0
    %v2406 = vadd.f32 %v2382, %v2405
    %v2407 = vpop.f32.mrf.mxu0
    %v2408 = vadd.f32 %v2384, %v2407
    %2409 = vmatmul.bf16.gmra.mxu0 %v143
    %v2410 = vpop.f32.mrf.mxu0
    %v2411 = vadd.f32 %v2387, %v2410
    %v2412 = vpop.f32.mrf.mxu0
    %v2413 = vadd.f32 %v2389, %v2412
    %2414 = vmatmul.bf16.gmra.mxu0 %v151
    %v2415 = vpop.f32.mrf.mxu0
    %v2416 = vadd.f32 %v2392, %v2415
    %v2417 = vpop.f32.mrf.mxu0
    %v2418 = vadd.f32 %v2394, %v2417
    %2419 = vdwg.mxu0
    %2420 = vmatpush.bf16.msra.mxu0 %v1411
    %2421 = vmatpush.bf16.msra.mxu0 %v1407
    %2422 = vmatpush.bf16.msra.mxu0 %v1403
    %2423 = vmatpush.bf16.msra.mxu0 %v1399
    %2424 = vmatpush.bf16.msra.mxu0 %v1395
    %2425 = vmatpush.bf16.msra.mxu0 %v1391
    %2426 = vmatpush.bf16.msra.mxu0 %v1387
    %2427 = vmatpush.bf16.msra.mxu0 %v1383
    %2428 = vmatmul.bf16.gmra.mxu0 %v136
    %v2429 = vpop.f32.mrf.mxu0
    %v2430 = vadd.f32 %v2406, %v2429
    %v2431 = vpop.f32.mrf.mxu0
    %v2432 = vadd.f32 %v2408, %v2431
    %2433 = vmatmul.bf16.gmra.mxu0 %v144
    %v2434 = vpop.f32.mrf.mxu0
    %v2435 = vadd.f32 %v2411, %v2434
    %v2436 = vpop.f32.mrf.mxu0
    %v2437 = vadd.f32 %v2413, %v2436
    %2438 = vmatmul.bf16.gmra.mxu0 %v152
    %v2439 = vpop.f32.mrf.mxu0
    %v2440 = vadd.f32 %v2416, %v2439
    %v2441 = vpop.f32.mrf.mxu0
    %v2442 = vadd.f32 %v2418, %v2441
    %2443 = vdwg.mxu0
    %2444 = vmatpush.bf16.msra.mxu0 %v1443
    %2445 = vmatpush.bf16.msra.mxu0 %v1439
    %2446 = vmatpush.bf16.msra.mxu0 %v1435
    %2447 = vmatpush.bf16.msra.mxu0 %v1431
    %2448 = vmatpush.bf16.msra.mxu0 %v1427
    %2449 = vmatpush.bf16.msra.mxu0 %v1423
    %2450 = vmatpush.bf16.msra.mxu0 %v1419
    %2451 = vmatpush.bf16.msra.mxu0 %v1415
    %2452 = vmatmul.bf16.gmra.mxu0 %v137
    %v2453 = vpop.f32.mrf.mxu0
    %v2454 = vadd.f32 %v2430, %v2453
    %v2455 = vpop.f32.mrf.mxu0
    %v2456 = vadd.f32 %v2432, %v2455
    %2457 = vmatmul.bf16.gmra.mxu0 %v145
    %v2458 = vpop.f32.mrf.mxu0
    %v2459 = vadd.f32 %v2435, %v2458
    %v2460 = vpop.f32.mrf.mxu0
    %v2461 = vadd.f32 %v2437, %v2460
    %2462 = vmatmul.bf16.gmra.mxu0 %v153
    %v2463 = vpop.f32.mrf.mxu0
    %v2464 = vadd.f32 %v2440, %v2463
    %v2465 = vpop.f32.mrf.mxu0
    %v2466 = vadd.f32 %v2442, %v2465
    %2467 = vdwg.mxu0
    %v2468 = vmax.f32 %v1878, 0.0
    %v2469 = vmax.f32 %v2070, 0.0
    %v2470 = vmax.f32 %v2262, 0.0
    %v2471 = vmax.f32 %v2454, 0.0
    %v2472 = vmax.f32 %v1880, 0.0
    %v2473 = vmax.f32 %v2072, 0.0
    %v2474 = vmax.f32 %v2264, 0.0
    %v2475 = vmax.f32 %v2456, 0.0
    %v2476 = vmax.f32 %v1883, 0.0
    %v2477 = vmax.f32 %v2075, 0.0
    %v2478 = vmax.f32 %v2267, 0.0
    %v2479 = vmax.f32 %v2459, 0.0
    %v2480 = vmax.f32 %v1885, 0.0
    %v2481 = vmax.f32 %v2077, 0.0
    %v2482 = vmax.f32 %v2269, 0.0
    %v2483 = vmax.f32 %v2461, 0.0
    %v2484 = vmax.f32 %v1888, 0.0
    %v2485 = vmax.f32 %v2080, 0.0
    %v2486 = vmax.f32 %v2272, 0.0
    %v2487 = vmax.f32 %v2464, 0.0
    %v2488 = vmax.f32 %v1890, 0.0
    %v2489 = vmax.f32 %v2082, 0.0
    %v2490 = vmax.f32 %v2274, 0.0
    %v2491 = vmax.f32 %v2466, 0.0
    %v2492 = vpack.c.bf16 %v2472, %v2468
    %v2493 = vpack.c.bf16 %v2473, %v2469
    %v2494 = vpack.c.bf16 %v2474, %v2470
    %v2495 = vpack.c.bf16 %v2475, %v2471
    %v2496 = vpack.c.bf16 %v2480, %v2476
    %v2497 = vpack.c.bf16 %v2481, %v2477
    %v2498 = vpack.c.bf16 %v2482, %v2478
    %v2499 = vpack.c.bf16 %v2483, %v2479
    %v2500 = vpack.c.bf16 %v2488, %v2484
    %v2501 = vpack.c.bf16 %v2489, %v2485
    %v2502 = vpack.c.bf16 %v2490, %v2486
    %v2503 = vpack.c.bf16 %v2491, %v2487
    %v2504 = vld [vmem:[#allocation8] sm:$0xf]
    %v2505 = vld [vmem:[#allocation8 + $0x4] sm:$0xf]
    %v2506 = vld [vmem:[#allocation8 + $0x8] sm:$0xf]
    %v2507 = vld [vmem:[#allocation8 + $0xc] sm:$0xf]
    %v2508 = vld [vmem:[#allocation8 + $0x10] sm:$0xf]
    %v2509 = vld [vmem:[#allocation8 + $0x14] sm:$0xf]
    %v2510 = vld [vmem:[#allocation8 + $0x18] sm:$0xf]
    %v2511 = vld [vmem:[#allocation8 + $0x1c] sm:$0xf]
    %v2512 = vld [vmem:[#allocation8 + $0x20] sm:$0xf]
    %v2513 = vld [vmem:[#allocation8 + $0x24] sm:$0xf]
    %v2514 = vld [vmem:[#allocation8 + $0x28] sm:$0xf]
    %v2515 = vld [vmem:[#allocation8 + $0x2c] sm:$0xf]
    %v2516 = vld [vmem:[#allocation8 + $0x30] sm:$0xf]
    %v2517 = vld [vmem:[#allocation8 + $0x34] sm:$0xf]
    %v2518 = vld [vmem:[#allocation8 + $0x38] sm:$0xf]
    %v2519 = vld [vmem:[#allocation8 + $0x3c] sm:$0xf]
    %v2520 = vld [vmem:[#allocation8 + $0x40] sm:$0xf]
    %v2521 = vld [vmem:[#allocation8 + $0x44] sm:$0xf]
    %v2522 = vld [vmem:[#allocation8 + $0x48] sm:$0xf]
    %v2523 = vld [vmem:[#allocation8 + $0x4c] sm:$0xf]
    %v2524 = vld [vmem:[#allocation8 + $0x50] sm:$0xf]
    %v2525 = vld [vmem:[#allocation8 + $0x54] sm:$0xf]
    %v2526 = vld [vmem:[#allocation8 + $0x58] sm:$0xf]
    %v2527 = vld [vmem:[#allocation8 + $0x5c] sm:$0xf]
    %v2528 = vld [vmem:[#allocation8 + $0x60] sm:$0xf]
    %v2529 = vld [vmem:[#allocation8 + $0x64] sm:$0xf]
    %v2530 = vld [vmem:[#allocation8 + $0x68] sm:$0xf]
    %v2531 = vld [vmem:[#allocation8 + $0x6c] sm:$0xf]
    %v2532 = vld [vmem:[#allocation8 + $0x70] sm:$0xf]
    %v2533 = vld [vmem:[#allocation8 + $0x74] sm:$0xf]
    %v2534 = vld [vmem:[#allocation8 + $0x78] sm:$0xf]
    %v2535 = vld [vmem:[#allocation8 + $0x7c] sm:$0xf]
    %v2536 = vld [vmem:[#allocation8 + $0x80] sm:$0xf]
    %v2537 = vld [vmem:[#allocation8 + $0x84] sm:$0xf]
    %v2538 = vld [vmem:[#allocation8 + $0x88] sm:$0xf]
    %v2539 = vld [vmem:[#allocation8 + $0x8c] sm:$0xf]
    %v2540 = vld [vmem:[#allocation8 + $0x90] sm:$0xf]
    %v2541 = vld [vmem:[#allocation8 + $0x94] sm:$0xf]
    %v2542 = vld [vmem:[#allocation8 + $0x98] sm:$0xf]
    %v2543 = vld [vmem:[#allocation8 + $0x9c] sm:$0xf]
    %v2544 = vld [vmem:[#allocation8 + $0xa0] sm:$0xf]
    %v2545 = vld [vmem:[#allocation8 + $0xa4] sm:$0xf]
    %v2546 = vld [vmem:[#allocation8 + $0xa8] sm:$0xf]
    %v2547 = vld [vmem:[#allocation8 + $0xac] sm:$0xf]
    %v2548 = vld [vmem:[#allocation8 + $0xb0] sm:$0xf]
    %v2549 = vld [vmem:[#allocation8 + $0xb4] sm:$0xf]
    %v2550 = vld [vmem:[#allocation8 + $0xb8] sm:$0xf]
    %v2551 = vld [vmem:[#allocation8 + $0xbc] sm:$0xf]
    %v2552 = vld [vmem:[#allocation8 + $0xc0] sm:$0xf]
    %v2553 = vld [vmem:[#allocation8 + $0xc4] sm:$0xf]
    %v2554 = vld [vmem:[#allocation8 + $0xc8] sm:$0xf]
    %v2555 = vld [vmem:[#allocation8 + $0xcc] sm:$0xf]
    %v2556 = vld [vmem:[#allocation8 + $0xd0] sm:$0xf]
    %v2557 = vld [vmem:[#allocation8 + $0xd4] sm:$0xf]
    %v2558 = vld [vmem:[#allocation8 + $0xd8] sm:$0xf]
    %v2559 = vld [vmem:[#allocation8 + $0xdc] sm:$0xf]
    %v2560 = vld [vmem:[#allocation8 + $0xe0] sm:$0xf]
    %v2561 = vld [vmem:[#allocation8 + $0xe4] sm:$0xf]
    %v2562 = vld [vmem:[#allocation8 + $0xe8] sm:$0xf]
    %v2563 = vld [vmem:[#allocation8 + $0xec] sm:$0xf]
    %v2564 = vld [vmem:[#allocation8 + $0xf0] sm:$0xf]
    %v2565 = vld [vmem:[#allocation8 + $0xf4] sm:$0xf]
    %v2566 = vld [vmem:[#allocation8 + $0xf8] sm:$0xf]
    %v2567 = vld [vmem:[#allocation8 + $0xfc] sm:$0xf]
    %v2568 = vld [vmem:[%s4] sm:$0x1]
    %v2570 = vperm.slane %v2568, 0
    %v2636 = vunpack.c.l.b16 %v2504
    %v2637 = vunpack.c.l.b16 %v2505
    %v2638 = vunpack.c.l.b16 %v2506
    %v2639 = vunpack.c.l.b16 %v2507
    %v2640 = vunpack.c.l.b16 %v2508
    %v2641 = vunpack.c.l.b16 %v2509
    %v2642 = vunpack.c.l.b16 %v2510
    %v2643 = vunpack.c.l.b16 %v2511
    %v2644 = vunpack.c.l.b16 %v2512
    %v2645 = vunpack.c.l.b16 %v2513
    %v2646 = vunpack.c.l.b16 %v2514
    %v2647 = vunpack.c.l.b16 %v2515
    %v2648 = vunpack.c.l.b16 %v2516
    %v2649 = vunpack.c.l.b16 %v2517
    %v2650 = vunpack.c.l.b16 %v2518
    %v2651 = vunpack.c.l.b16 %v2519
    %v2652 = vunpack.c.l.b16 %v2520
    %v2653 = vunpack.c.l.b16 %v2521
    %v2654 = vunpack.c.l.b16 %v2522
    %v2655 = vunpack.c.l.b16 %v2523
    %v2656 = vunpack.c.l.b16 %v2524
    %v2657 = vunpack.c.l.b16 %v2525
    %v2658 = vunpack.c.l.b16 %v2526
    %v2659 = vunpack.c.l.b16 %v2527
    %v2660 = vunpack.c.l.b16 %v2528
    %v2661 = vunpack.c.l.b16 %v2529
    %v2662 = vunpack.c.l.b16 %v2530
    %v2663 = vunpack.c.l.b16 %v2531
    %v2664 = vunpack.c.l.b16 %v2532
    %v2665 = vunpack.c.l.b16 %v2533
    %v2666 = vunpack.c.l.b16 %v2534
    %v2667 = vunpack.c.l.b16 %v2535
    %v2668 = vunpack.c.l.b16 %v2536
    %v2669 = vunpack.c.l.b16 %v2537
    %v2670 = vunpack.c.l.b16 %v2538
    %v2671 = vunpack.c.l.b16 %v2539
    %v2672 = vunpack.c.l.b16 %v2540
    %v2673 = vunpack.c.l.b16 %v2541
    %v2674 = vunpack.c.l.b16 %v2542
    %v2675 = vunpack.c.l.b16 %v2543
    %v2676 = vunpack.c.l.b16 %v2544
    %v2677 = vunpack.c.l.b16 %v2545
    %v2678 = vunpack.c.l.b16 %v2546
    %v2679 = vunpack.c.l.b16 %v2547
    %v2680 = vunpack.c.l.b16 %v2548
    %v2681 = vunpack.c.l.b16 %v2549
    %v2682 = vunpack.c.l.b16 %v2550
    %v2683 = vunpack.c.l.b16 %v2551
    %v2684 = vunpack.c.l.b16 %v2552
    %v2685 = vunpack.c.l.b16 %v2553
    %v2686 = vunpack.c.l.b16 %v2554
    %v2687 = vunpack.c.l.b16 %v2555
    %v2688 = vunpack.c.l.b16 %v2556
    %v2689 = vunpack.c.l.b16 %v2557
    %v2690 = vunpack.c.l.b16 %v2558
    %v2691 = vunpack.c.l.b16 %v2559
    %v2692 = vunpack.c.l.b16 %v2560
    %v2693 = vunpack.c.l.b16 %v2561
    %v2694 = vunpack.c.l.b16 %v2562
    %v2695 = vunpack.c.l.b16 %v2563
    %v2696 = vunpack.c.l.b16 %v2564
    %v2697 = vunpack.c.l.b16 %v2565
    %v2698 = vunpack.c.l.b16 %v2566
    %v2699 = vunpack.c.l.b16 %v2567
    %v2700 = vpack.c.b16 %v2637, %v2636
    %v2701 = vpack.c.b16 %v2639, %v2638
    %v2702 = vpack.c.b16 %v2641, %v2640
    %v2703 = vpack.c.b16 %v2643, %v2642
    %v2704 = vpack.c.b16 %v2645, %v2644
    %v2705 = vpack.c.b16 %v2647, %v2646
    %v2706 = vpack.c.b16 %v2649, %v2648
    %v2707 = vpack.c.b16 %v2651, %v2650
    %v2708 = vpack.c.b16 %v2653, %v2652
    %v2709 = vpack.c.b16 %v2655, %v2654
    %v2710 = vpack.c.b16 %v2657, %v2656
    %v2711 = vpack.c.b16 %v2659, %v2658
    %v2712 = vpack.c.b16 %v2661, %v2660
    %v2713 = vpack.c.b16 %v2663, %v2662
    %v2714 = vpack.c.b16 %v2665, %v2664
    %v2715 = vpack.c.b16 %v2667, %v2666
    %v2716 = vpack.c.b16 %v2669, %v2668
    %v2717 = vpack.c.b16 %v2671, %v2670
    %v2718 = vpack.c.b16 %v2673, %v2672
    %v2719 = vpack.c.b16 %v2675, %v2674
    %v2720 = vpack.c.b16 %v2677, %v2676
    %v2721 = vpack.c.b16 %v2679, %v2678
    %v2722 = vpack.c.b16 %v2681, %v2680
    %v2723 = vpack.c.b16 %v2683, %v2682
    %v2724 = vpack.c.b16 %v2685, %v2684
    %v2725 = vpack.c.b16 %v2687, %v2686
    %v2726 = vpack.c.b16 %v2689, %v2688
    %v2727 = vpack.c.b16 %v2691, %v2690
    %v2728 = vpack.c.b16 %v2693, %v2692
    %v2729 = vpack.c.b16 %v2695, %v2694
    %v2730 = vpack.c.b16 %v2697, %v2696
    %v2731 = vpack.c.b16 %v2699, %v2698
    %2764 = vmatpush.bf16.msra.mxu0 %v2707
    %2765 = vmatpush.bf16.msra.mxu0 %v2706
    %2766 = vmatpush.bf16.msra.mxu0 %v2705
    %2767 = vmatpush.bf16.msra.mxu0 %v2704
    %2768 = vmatpush.bf16.msra.mxu0 %v2703
    %2769 = vmatpush.bf16.msra.mxu0 %v2702
    %2770 = vmatpush.bf16.msra.mxu0 %v2701
    %2771 = vmatpush.bf16.msra.mxu0 %v2700
    %2772 = vmatmul.bf16.gmra.mxu0 %v2492
    %v2773 = vpop.f32.mrf.mxu0
    %v2774 = vadd.f32 %v2570, %v2773
    %v2775 = vpop.f32.mrf.mxu0
    %v2776 = vadd.f32 %v2570, %v2775
    %2777 = vmatmul.bf16.gmra.mxu0 %v2496
    %v2778 = vpop.f32.mrf.mxu0
    %v2779 = vadd.f32 %v2570, %v2778
    %v2780 = vpop.f32.mrf.mxu0
    %v2781 = vadd.f32 %v2570, %v2780
    %2782 = vmatmul.bf16.gmra.mxu0 %v2500
    %v2783 = vpop.f32.mrf.mxu0
    %v2784 = vadd.f32 %v2570, %v2783
    %v2785 = vpop.f32.mrf.mxu0
    %v2786 = vadd.f32 %v2570, %v2785
    %2787 = vdwg.mxu0
    %2788 = vmatpush.bf16.msra.mxu0 %v2715
    %2789 = vmatpush.bf16.msra.mxu0 %v2714
    %2790 = vmatpush.bf16.msra.mxu0 %v2713
    %2791 = vmatpush.bf16.msra.mxu0 %v2712
    %2792 = vmatpush.bf16.msra.mxu0 %v2711
    %2793 = vmatpush.bf16.msra.mxu0 %v2710
    %2794 = vmatpush.bf16.msra.mxu0 %v2709
    %2795 = vmatpush.bf16.msra.mxu0 %v2708
    %2796 = vmatmul.bf16.gmra.mxu0 %v2493
    %v2797 = vpop.f32.mrf.mxu0
    %v2798 = vadd.f32 %v2774, %v2797
    %v2799 = vpop.f32.mrf.mxu0
    %v2800 = vadd.f32 %v2776, %v2799
    %2801 = vmatmul.bf16.gmra.mxu0 %v2497
    %v2802 = vpop.f32.mrf.mxu0
    %v2803 = vadd.f32 %v2779, %v2802
    %v2804 = vpop.f32.mrf.mxu0
    %v2805 = vadd.f32 %v2781, %v2804
    %2806 = vmatmul.bf16.gmra.mxu0 %v2501
    %v2807 = vpop.f32.mrf.mxu0
    %v2808 = vadd.f32 %v2784, %v2807
    %v2809 = vpop.f32.mrf.mxu0
    %v2810 = vadd.f32 %v2786, %v2809
    %2811 = vdwg.mxu0
    %2812 = vmatpush.bf16.msra.mxu0 %v2723
    %2813 = vmatpush.bf16.msra.mxu0 %v2722
    %2814 = vmatpush.bf16.msra.mxu0 %v2721
    %2815 = vmatpush.bf16.msra.mxu0 %v2720
    %2816 = vmatpush.bf16.msra.mxu0 %v2719
    %2817 = vmatpush.bf16.msra.mxu0 %v2718
    %2818 = vmatpush.bf16.msra.mxu0 %v2717
    %2819 = vmatpush.bf16.msra.mxu0 %v2716
    %2820 = vmatmul.bf16.gmra.mxu0 %v2494
    %v2821 = vpop.f32.mrf.mxu0
    %v2822 = vadd.f32 %v2798, %v2821
    %v2823 = vpop.f32.mrf.mxu0
    %v2824 = vadd.f32 %v2800, %v2823
    %2825 = vmatmul.bf16.gmra.mxu0 %v2498
    %v2826 = vpop.f32.mrf.mxu0
    %v2827 = vadd.f32 %v2803, %v2826
    %v2828 = vpop.f32.mrf.mxu0
    %v2829 = vadd.f32 %v2805, %v2828
    %2830 = vmatmul.bf16.gmra.mxu0 %v2502
    %v2831 = vpop.f32.mrf.mxu0
    %v2832 = vadd.f32 %v2808, %v2831
    %v2833 = vpop.f32.mrf.mxu0
    %v2834 = vadd.f32 %v2810, %v2833
    %2835 = vdwg.mxu0
    %2836 = vmatpush.bf16.msra.mxu0 %v2731
    %2837 = vmatpush.bf16.msra.mxu0 %v2730
    %2838 = vmatpush.bf16.msra.mxu0 %v2729
    %2839 = vmatpush.bf16.msra.mxu0 %v2728
    %2840 = vmatpush.bf16.msra.mxu0 %v2727
    %2841 = vmatpush.bf16.msra.mxu0 %v2726
    %2842 = vmatpush.bf16.msra.mxu0 %v2725
    %2843 = vmatpush.bf16.msra.mxu0 %v2724
    %2844 = vmatmul.bf16.gmra.mxu0 %v2495
    %v2845 = vpop.f32.mrf.mxu0
    %v2846 = vadd.f32 %v2822, %v2845
    %v2847 = vpop.f32.mrf.mxu0
    %v2848 = vadd.f32 %v2824, %v2847
    %2849 = vmatmul.bf16.gmra.mxu0 %v2499
    %v2850 = vpop.f32.mrf.mxu0
    %v2851 = vadd.f32 %v2827, %v2850
    %v2852 = vpop.f32.mrf.mxu0
    %v2853 = vadd.f32 %v2829, %v2852
    %2854 = vmatmul.bf16.gmra.mxu0 %v2503
    %v2855 = vpop.f32.mrf.mxu0
    %v2856 = vadd.f32 %v2832, %v2855
    %v2857 = vpop.f32.mrf.mxu0
    %v2858 = vadd.f32 %v2834, %v2857
    %2859 = vdwg.mxu0
    %2860 = vst [vmem:[#allocation10] sm:$0xff] %v2846
    %2861 = vst [vmem:[#allocation10 + $0x8] sm:$0xff] %v2848
    %2862 = vst [vmem:[#allocation10 + $0x10] sm:$0xff] %v2851
    %2863 = vst [vmem:[#allocation10 + $0x18] sm:$0xff] %v2853
    %2864 = vst [vmem:[#allocation10 + $0x20] sm:$0xff] %v2856
    %2865 = vst [vmem:[#allocation10 + $0x28] sm:$0xff] %v2858
    // Predicated region
    $region38: #{tpu_custom_call.1} parent=1 // pred_check
      _
    $region39: #{tpu_custom_call.1} parent=1 // pred_check_branch
      %2867 = sbr.rel (0) target = $region41
    $region40: #{tpu_custom_call.1} parent=1 // pred_region
      %2869 = vsyncadd [#allocation4], 0
      %s2870 = sshll.u32 [#allocation10], 4
      %s2871 = int_to_ptr.vmem [resolvable:$true] %s2870
      %s2872 = sshll.u32 %s5, 4
      %s2873 = int_to_ptr.hbm [resolvable:$true] %s2872
      %2878 = dma.vmem_to_hbm [thread:$0]  %s2871, 768, %s2873, [#allocation4], 128, 128, 8
    $region41: #{tpu_custom_call.1} parent=1 // pred_fallthru
      _
    // Predicated region
    $region42: #{tpu_custom_call.1} parent=1 // pred_check
      _
    $region43: #{tpu_custom_call.1} parent=1 // pred_check_branch
      %2880 = sbr.rel (0) target = $region45
    $region44: #{tpu_custom_call.1} parent=1 // pred_region
      %2882 = dma.done [#allocation4], 768
    $region45: #{tpu_custom_call.1} parent=1 // pred_fallthru
      _
    %2883 = vsyncpa [#allocation3], 1
    %2884 = vsyncpa [#allocation6], 1
    %2885 = vsyncpa [#allocation9], 1
    %2886 = vsyncpa [#allocation4], 1

</llo_original>
